<compile_context>
chip_gen: v5e
topology: v5e:2x2
jax: 0.10.0
libtpu: 0.0.40
codegen_flags: <defaults>
</compile_context>

<pallas_src>
import jax
import jax.numpy as jnp
from jax.experimental import pallas as pl
from jax.experimental.pallas import tpu as pltpu

HIDDEN = 768
NUM_CLASSES = 2
CLASS_PAD = 128        # lane-width-padded classifier output
DEFAULT_BATCH_TILE = 256


def text_encoder_kernel(cls_ref, wp_ref, bp_ref, wc_ref, bc_ref, out_ref):
    """Fused RoBERTa pooler + memory_class head on one batch tile.

    cls_ref : [TB, H]    f32/bf16  CLS-token hidden states (only these rows DMA'd)
    wp_ref  : [H, H]     bf16      pooler dense weight (in, out) -- VMEM-resident
    bp_ref  : [1, H]     f32       pooler dense bias
    wc_ref  : [H, 128]   bf16      memory_class weight, zero-padded to lane width
    bc_ref  : [1, 128]   f32       memory_class bias, zero-padded
    out_ref : [TB, 128]  f32       lane-dense logits slab (cols [0:2] are real)
    """
    # no-op cast if the encoder already hands us bf16 activations
    cls_bf16 = cls_ref[...].astype(jnp.bfloat16)

    # RoBERTa pooler: tanh(cls @ Wp + bp); bf16 MXU matmul, f32 accumulation.
    # Epilogue (bias add, tanh) stays f32 -- v5e has no bf16 VPU/EUP datapath.
    pooled = jnp.tanh(
        jnp.dot(cls_bf16, wp_ref[...], preferred_element_type=jnp.float32)
        + bp_ref[...]
    )

    # nn.Dropout(p) in eval mode is the identity (deterministic inference).
    # TODO(synk): training-mode dropout (pltpu.prng_random_bits mask) not emitted.

    # memory_class head: pooled @ Wc + bc -> [TB, 128] lane-padded; single
    # unmasked lane-dense store instead of a 2/128 masked partial store.
    logits = (
        jnp.dot(pooled.astype(jnp.bfloat16), wc_ref[...],
                preferred_element_type=jnp.float32)
        + bc_ref[...]
    )
    out_ref[...] = logits.astype(out_ref.dtype)


def prepare_text_encoder_params(wp, bp, wc, bc):
    """One-time parameter preparation -- call at load time, NOT per forward.

    wp: [768, 768], bp: [768], wc: [768, 2], bc: [2]  (all float32)
    Returns (wp_bf16, bp2, wc_pad, bc_pad) ready to feed the kernel.
    """
    wp_bf16 = wp.astype(jnp.bfloat16)                           # 1.125 MiB
    bp2 = bp.reshape(1, HIDDEN).astype(jnp.float32)
    wc_pad = (
        jnp.zeros((HIDDEN, CLASS_PAD), jnp.bfloat16)
        .at[:, :NUM_CLASSES].set(wc.astype(jnp.bfloat16))
    )
    bc_pad = (
        jnp.zeros((1, CLASS_PAD), jnp.float32)
        .at[:, :NUM_CLASSES].set(bc.reshape(1, NUM_CLASSES).astype(jnp.float32))
    )
    # Materialize now so no cast/pad ops run per forward call.
    return jax.block_until_ready((wp_bf16, bp2, wc_pad, bc_pad))


def text_encoder_forward(hidden_states, params, *, batch_tile=DEFAULT_BATCH_TILE):
    """hidden_states: [B, S, H] (RoBERTa last hidden states, f32 or bf16).

    params: output of prepare_text_encoder_params (pre-cast / pre-padded).
    Returns (memory_logits [B, 2], 'none') matching TextEncoder.forward.
    """
    wp_bf16, bp2, wc_pad, bc_pad = params
    B, S, H = hidden_states.shape
    assert H == HIDDEN

    # Zero-copy view [B, S*H] (default row-major layout): the first HIDDEN
    # lanes of each row are exactly hidden_states[b, 0, :] (the CLS token), so
    # a (TB, HIDDEN) block at column-block 0 DMAs only the CLS rows.
    # TODO(synk): if XLA ever picks a non-default layout for hidden_states this
    # reshape materializes a copy (still correct, just loses the CLS-only DMA).
    hs_flat = hidden_states.reshape(B, S * H)

    # Batch tiling: TB must be the full B or a multiple of 8 (sublane rule).
    TB = B if B <= batch_tile else batch_tile
    nb = pl.cdiv(B, TB)

    logits_pad = pl.pallas_call(
        text_encoder_kernel,
        out_shape=jax.ShapeDtypeStruct((B, CLASS_PAD), jnp.float32),
        grid_spec=pltpu.PrefetchScalarGridSpec(
            num_scalar_prefetch=0,
            grid=(nb,),
            in_specs=[
                # CLS slab: tiled over batch.
                pl.BlockSpec((TB, HIDDEN), lambda i: (i, 0)),
                # Weights/biases: constant block index => stay VMEM-resident,
                # no re-DMA across batch tiles.
                pl.BlockSpec((HIDDEN, HIDDEN), lambda i: (0, 0)),     # Wp (bf16)
                pl.BlockSpec((1, HIDDEN), lambda i: (0, 0)),          # bp
                pl.BlockSpec((HIDDEN, CLASS_PAD), lambda i: (0, 0)),  # Wc padded
                pl.BlockSpec((1, CLASS_PAD), lambda i: (0, 0)),       # bc padded
            ],
            out_specs=pl.BlockSpec((TB, CLASS_PAD), lambda i: (i, 0)),
        ),
        compiler_params=pltpu.CompilerParams(
            # batch tiles are independent -> shard across v7x's two TCs;
            # no-op on single-TC v5e/v6e.
            dimension_semantics=("parallel",),
            # 2x CLS tile + 2x out tile + resident weights ~= 5 MiB at TB=256.
            vmem_limit_bytes=16 << 20,
        ),
    )(hs_flat, wp_bf16, bp2, wc_pad, bc_pad)

    # TODO(synk): at per-request batch sizes the Wp fetch is the whole cost;
    # fuse into the final encoder pallas_call or cross-call-prefetch it (P10).
    return logits_pad[:, :NUM_CLASSES], "none"


def _init_params(key):
    """Deterministic synthetic parameters (PyTorch-Linear-style uniform init)."""
    k1, k2, k3, k4 = jax.random.split(key, 4)
    bound_p = 1.0 / jnp.sqrt(jnp.float32(HIDDEN))
    wp = jax.random.uniform(k1, (HIDDEN, HIDDEN), jnp.float32, -bound_p, bound_p)
    bp = jax.random.uniform(k2, (HIDDEN,), jnp.float32, -bound_p, bound_p)
    wc = jax.random.uniform(k3, (HIDDEN, NUM_CLASSES), jnp.float32, -bound_p, bound_p)
    bc = jax.random.uniform(k4, (NUM_CLASSES,), jnp.float32, -bound_p, bound_p)
    return wp, bp, wc, bc


def _reference_logits(hidden_states, wp, bp, wc, bc):
    """Pure-f32 JAX reference of the same math (eval-mode dropout = identity)."""
    cls = hidden_states[:, 0, :]
    pooled = jnp.tanh(cls @ wp + bp)
    return pooled @ wc + bc


if __name__ == "__main__":
    key = jax.random.PRNGKey(0)
    k_hid, k_par, k_hid2 = jax.random.split(key, 3)

    wp, bp, wc, bc = _init_params(k_par)
    # Load-time prep (bf16 cast + lane-pad) happens exactly once here.
    params = prepare_text_encoder_params(wp, bp, wc, bc)

    # --- test 1: tiny batch, single grid step (B <= TB) -----------------
    B, S = 2, 8
    hidden_states = jax.random.normal(k_hid, (B, S, HIDDEN), dtype=jnp.float32)

    logits, extra = text_encoder_forward(hidden_states, params)
    logits = jax.block_until_ready(logits)

    logits_ref = _reference_logits(hidden_states, wp, bp, wc, bc)
    assert logits.shape == (B, NUM_CLASSES)
    assert extra == "none"
    # bf16 weights/activations on the MXU -> ~1e-3..1e-2 abs error on O(0.3) logits.
    assert jnp.allclose(logits, logits_ref, atol=5e-2, rtol=5e-2)

    # --- test 2: exercise the batch grid (multiple tiles, resident weights) --
    B2, S2, TB2 = 16, 4, 8
    hidden_states2 = jax.random.normal(k_hid2, (B2, S2, HIDDEN), dtype=jnp.float32)

    logits2, _ = text_encoder_forward(hidden_states2, params, batch_tile=TB2)
    logits2 = jax.block_until_ready(logits2)

    logits2_ref = _reference_logits(hidden_states2, wp, bp, wc, bc)
    assert logits2.shape == (B2, NUM_CLASSES)
    assert jnp.allclose(logits2, logits2_ref, atol=5e-2, rtol=5e-2)

    print("KERNEL_OK")
</pallas_src>

<mosaic_0001>
module attributes {stable_mosaic.version = 11 : i64} {
  func.func @text_encoder_kernel(%arg0: i32, %arg1: memref<2x768xf32, #tpu.memory_space<vmem>>, %arg2: memref<768x768xbf16, #tpu.memory_space<vmem>>, %arg3: memref<1x768xf32, #tpu.memory_space<vmem>>, %arg4: memref<768x128xbf16, #tpu.memory_space<vmem>>, %arg5: memref<1x128xf32, #tpu.memory_space<vmem>>, %arg6: memref<2x128xf32, #tpu.memory_space<vmem>>) attributes {dimension_semantics = [#tpu.dimension_semantics<parallel>], iteration_bounds = array<i64: 1>, scalar_prefetch = 0 : i64, scratch_operands = 0 : i64, tpu.core_type = #tpu.core_type<tc>, window_params = [{transform_indices = @transform_0, window_bounds = array<i64: 2, 768>}, {pipeline_mode = #tpu.pipeline_mode<synchronous>, transform_indices = @transform_1, window_bounds = array<i64: 768, 768>}, {pipeline_mode = #tpu.pipeline_mode<synchronous>, transform_indices = @transform_2, window_bounds = array<i64: 1, 768>}, {pipeline_mode = #tpu.pipeline_mode<synchronous>, transform_indices = @transform_3, window_bounds = array<i64: 768, 128>}, {pipeline_mode = #tpu.pipeline_mode<synchronous>, transform_indices = @transform_4, window_bounds = array<i64: 1, 128>}, {transform_indices = @transform_5, window_bounds = array<i64: 2, 128>}]} {
    %c0 = arith.constant 0 : index
    %c0_0 = arith.constant 0 : index
    %0 = vector.load %arg1[%c0, %c0_0] : memref<2x768xf32, #tpu.memory_space<vmem>>, vector<2x768xf32>
    %1 = arith.truncf %0 : vector<2x768xf32> to vector<2x768xbf16>
    %c0_1 = arith.constant 0 : index
    %c0_2 = arith.constant 0 : index
    %2 = vector.load %arg2[%c0_1, %c0_2] : memref<768x768xbf16, #tpu.memory_space<vmem>>, vector<768x768xbf16>
    %cst = arith.constant dense<0.000000e+00> : vector<2x768xf32>
    %3 = tpu.matmul %1, %2, %cst {dimension_numbers = #tpu.dot_dimension_numbers<[1], [0], [0], [1], [0, 0, 1, 1], [], []>} : vector<2x768xbf16>, vector<768x768xbf16>, vector<2x768xf32> -> vector<2x768xf32>
    %c0_3 = arith.constant 0 : index
    %c0_4 = arith.constant 0 : index
    %4 = vector.load %arg3[%c0_3, %c0_4] : memref<1x768xf32, #tpu.memory_space<vmem>>, vector<1x768xf32>
    %5 = vector.broadcast %4 : vector<1x768xf32> to vector<2x768xf32>
    %6 = arith.addf %3, %5 : vector<2x768xf32>
    %7 = math.tanh %6 : vector<2x768xf32>
    %8 = arith.truncf %7 : vector<2x768xf32> to vector<2x768xbf16>
    %c0_5 = arith.constant 0 : index
    %c0_6 = arith.constant 0 : index
    %9 = vector.load %arg4[%c0_5, %c0_6] : memref<768x128xbf16, #tpu.memory_space<vmem>>, vector<768x128xbf16>
    %cst_7 = arith.constant dense<0.000000e+00> : vector<2x128xf32>
    %10 = tpu.matmul %8, %9, %cst_7 {dimension_numbers = #tpu.dot_dimension_numbers<[1], [0], [0], [1], [0, 0, 1, 1], [], []>} : vector<2x768xbf16>, vector<768x128xbf16>, vector<2x128xf32> -> vector<2x128xf32>
    %c0_8 = arith.constant 0 : index
    %c0_9 = arith.constant 0 : index
    %11 = vector.load %arg5[%c0_8, %c0_9] : memref<1x128xf32, #tpu.memory_space<vmem>>, vector<1x128xf32>
    %12 = vector.broadcast %11 : vector<1x128xf32> to vector<2x128xf32>
    %13 = arith.addf %10, %12 : vector<2x128xf32>
    %c0_10 = arith.constant 0 : index
    %c0_11 = arith.constant 0 : index
    %14 = vector.load %arg6[%c0_10, %c0_11] : memref<2x128xf32, #tpu.memory_space<vmem>>, vector<2x128xf32>
    tpu.vector_store %arg6[%c0_10, %c0_11], %13 {strides = array<i32>} : memref<2x128xf32, #tpu.memory_space<vmem>>, vector<2x128xf32>,
    return
  }
  func.func @transform_0(%arg0: i32) -> (i32, i32) {
    %c0_i32 = arith.constant 0 : i32
    %c0_i32_0 = arith.constant 0 : i32
    return %arg0, %c0_i32 : i32, i32
  }
  func.func @transform_1(%arg0: i32) -> (i32, i32) {
    %c0_i32 = arith.constant 0 : i32
    %c0_i32_0 = arith.constant 0 : i32
    %c0_i32_1 = arith.constant 0 : i32
    return %c0_i32, %c0_i32_0 : i32, i32
  }
  func.func @transform_2(%arg0: i32) -> (i32, i32) {
    %c0_i32 = arith.constant 0 : i32
    %c0_i32_0 = arith.constant 0 : i32
    %c0_i32_1 = arith.constant 0 : i32
    return %c0_i32, %c0_i32_0 : i32, i32
  }
  func.func @transform_3(%arg0: i32) -> (i32, i32) {
    %c0_i32 = arith.constant 0 : i32
    %c0_i32_0 = arith.constant 0 : i32
    %c0_i32_1 = arith.constant 0 : i32
    return %c0_i32, %c0_i32_0 : i32, i32
  }
  func.func @transform_4(%arg0: i32) -> (i32, i32) {
    %c0_i32 = arith.constant 0 : i32
    %c0_i32_0 = arith.constant 0 : i32
    %c0_i32_1 = arith.constant 0 : i32
    return %c0_i32, %c0_i32_0 : i32, i32
  }
  func.func @transform_5(%arg0: i32) -> (i32, i32) {
    %c0_i32 = arith.constant 0 : i32
    %c0_i32_0 = arith.constant 0 : i32
    return %arg0, %c0_i32 : i32, i32
  }
}

</mosaic_0001>

<llo_original>
// kernel: tpu_custom_call.1
$region0: #{tpu_custom_call.1}
  #allocation0 [shape = 'u32[]', space=smem, size = 0x4, offset = 0x4, fixed_abs, tag = 'smem constant byte address 0x4 - core index']
  #allocation1 [shape = 'u32[72,128]{1,0:T(1,128)}', space=vmem, size = 0x9000, scoped, tag = 'internal scratch']
  %s0 = inlined_call_operand.hbm [shape: f32[2,6144], index: 0, kind: input, shape index: {}]
  %s1 = inlined_call_operand.hbm [shape: bf16[768,768], index: 1, kind: input, shape index: {}]
  %s2 = inlined_call_operand.hbm [shape: f32[1,768], index: 2, kind: input, shape index: {}]
  %s3 = inlined_call_operand.hbm [shape: bf16[768,128], index: 3, kind: input, shape index: {}]
  %s4 = inlined_call_operand.hbm [shape: f32[1,128], index: 4, kind: input, shape index: {}]
  %s5 = inlined_call_operand.hbm [shape: f32[2,128], index: 5, kind: output, shape index: {}]
  %s6 = sld [smem:[#allocation0]]
  $region50: #{tpu_custom_call.1} parent=0
    _
  %s8 = ssub.s32 1, %s6
  %s9 = scalar_select 0, %s8, %s6
  $region1: #{tpu_custom_call.1} parent=0
    #allocation2 [shape = 'u8[6144]{0}', space=vmem, size = 0x1800, scoped, tag = 'input window, operand 0, single buffered']
    #allocation3 [shape = 's32[1]{0}', space=sflag, size = 0x4, scoped, tag = 'scoped memory for tpu_custom_call.1']
    #allocation4 [shape = 's32[1]{0}', space=sflag, size = 0x4, scoped, tag = 'scoped memory for tpu_custom_call.1']
    #allocation5 [shape = 'u8[1179648]{0}', space=vmem, size = 0x120000, scoped, tag = 'input window, operand 1, single buffered']
    #allocation6 [shape = 's32[1]{0}', space=sflag, size = 0x4, scoped, tag = 'scoped memory for tpu_custom_call.1']
    #allocation7 [shape = 'u8[3072]{0}', space=vmem, size = 0xc00, scoped, tag = 'input window, operand 2, single buffered']
    #allocation8 [shape = 'u8[196608]{0}', space=vmem, size = 0x30000, scoped, tag = 'input window, operand 3, single buffered']
    #allocation9 [shape = 's32[1]{0}', space=sflag, size = 0x4, scoped, tag = 'scoped memory for tpu_custom_call.1']
    #allocation10 [shape = 'u8[512]{0}', space=vmem, size = 0x400, scoped, tag = 'input window, operand 4, single buffered']
    #allocation11 [shape = 'u8[1024]{0}', space=vmem, size = 0x400, scoped, tag = 'output window, operand 0, single buffered']
    %10 = vsyncpa [#allocation3], 0
    %11 = vsyncpa [#allocation6], 0
    %12 = vsyncpa [#allocation9], 0
    %13 = vsyncpa [#allocation4], 0
    // Predicated region
    $region2: #{tpu_custom_call.1} parent=1 // pred_check
      _
    $region3: #{tpu_custom_call.1} parent=1 // pred_check_branch
      %15 = sbr.rel (0) target = $region5
    $region4: #{tpu_custom_call.1} parent=1 // pred_region
      %17 = vsyncadd [#allocation3], 0
      %s19 = sshll.u32 %s0, 4
      %s20 = int_to_ptr.hbm [resolvable:$true] %s19
      %s21 = sshll.u32 [#allocation2], 4
      %s22 = int_to_ptr.vmem [resolvable:$true] %s21
      %24 = dma.hbm_to_vmem [thread:$0]  %s20, 192, %s22, [#allocation3]
    $region5: #{tpu_custom_call.1} parent=1 // pred_fallthru
      _
    // Predicated region
    $region6: #{tpu_custom_call.1} parent=1 // pred_check
      _
    $region7: #{tpu_custom_call.1} parent=1 // pred_check_branch
      %26 = sbr.rel (0) target = $region9
    $region8: #{tpu_custom_call.1} parent=1 // pred_region
      %28 = vsyncadd [#allocation6], 0
      %s29 = sshll.u32 %s1, 4
      %s30 = int_to_ptr.hbm [resolvable:$true] %s29
      %s31 = sshll.u32 [#allocation5], 4
      %s32 = int_to_ptr.vmem [resolvable:$true] %s31
      %37 = dma.hbm_to_vmem [thread:$0]  %s30, 36864, %s32, [#allocation6], 384, 384, 24
    $region9: #{tpu_custom_call.1} parent=1 // pred_fallthru
      _
    // Predicated region
    $region10: #{tpu_custom_call.1} parent=1 // pred_check
      _
    $region11: #{tpu_custom_call.1} parent=1 // pred_check_branch
      %39 = sbr.rel (0) target = $region13
    $region12: #{tpu_custom_call.1} parent=1 // pred_region
      %41 = vsyncadd [#allocation6], 0
      %s43 = sshll.u32 %s2, 4
      %s44 = int_to_ptr.hbm [resolvable:$true] %s43
      %s45 = sshll.u32 [#allocation7], 4
      %s46 = int_to_ptr.vmem [resolvable:$true] %s45
      %48 = dma.hbm_to_vmem [thread:$0]  %s44, 96, %s46, [#allocation6]
    $region13: #{tpu_custom_call.1} parent=1 // pred_fallthru
      _
    // Predicated region
    $region14: #{tpu_custom_call.1} parent=1 // pred_check
      _
    $region15: #{tpu_custom_call.1} parent=1 // pred_check_branch
      %50 = sbr.rel (0) target = $region17
    $region16: #{tpu_custom_call.1} parent=1 // pred_region
      %52 = vsyncadd [#allocation9], 0
      %s53 = sshll.u32 %s3, 4
      %s54 = int_to_ptr.hbm [resolvable:$true] %s53
      %s55 = sshll.u32 [#allocation8], 4
      %s56 = int_to_ptr.vmem [resolvable:$true] %s55
      %61 = dma.hbm_to_vmem [thread:$0]  %s54, 6144, %s56, [#allocation9], 64, 64, 4
    $region17: #{tpu_custom_call.1} parent=1 // pred_fallthru
      _
    // Predicated region
    $region18: #{tpu_custom_call.1} parent=1 // pred_check
      _
    $region19: #{tpu_custom_call.1} parent=1 // pred_check_branch
      %63 = sbr.rel (0) target = $region21
    $region20: #{tpu_custom_call.1} parent=1 // pred_region
      %65 = vsyncadd [#allocation9], 0
      %s67 = sshll.u32 %s4, 4
      %s68 = int_to_ptr.hbm [resolvable:$true] %s67
      %s69 = sshll.u32 [#allocation10], 4
      %s70 = int_to_ptr.vmem [resolvable:$true] %s69
      %72 = dma.hbm_to_vmem [thread:$0]  %s68, 16, %s70, [#allocation9]
    $region21: #{tpu_custom_call.1} parent=1 // pred_fallthru
      _
    // Predicated region
    $region22: #{tpu_custom_call.1} parent=1 // pred_check
      _
    $region23: #{tpu_custom_call.1} parent=1 // pred_check_branch
      %74 = sbr.rel (0) target = $region25
    $region24: #{tpu_custom_call.1} parent=1 // pred_region
      %76 = dma.done [#allocation3], 192
    $region25: #{tpu_custom_call.1} parent=1 // pred_fallthru
      _
    // Predicated region
    $region26: #{tpu_custom_call.1} parent=1 // pred_check
      _
    $region27: #{tpu_custom_call.1} parent=1 // pred_check_branch
      %78 = sbr.rel (0) target = $region29
    $region28: #{tpu_custom_call.1} parent=1 // pred_region
      %80 = dma.done [#allocation6], 36864
    $region29: #{tpu_custom_call.1} parent=1 // pred_fallthru
      _
    // Predicated region
    $region30: #{tpu_custom_call.1} parent=1 // pred_check
      _
    $region31: #{tpu_custom_call.1} parent=1 // pred_check_branch
      %82 = sbr.rel (0) target = $region33
    $region32: #{tpu_custom_call.1} parent=1 // pred_region
      %84 = dma.done [#allocation6], 96
    $region33: #{tpu_custom_call.1} parent=1 // pred_fallthru
      _
    // Predicated region
    $region34: #{tpu_custom_call.1} parent=1 // pred_check
      _
    $region35: #{tpu_custom_call.1} parent=1 // pred_check_branch
      %86 = sbr.rel (0) target = $region37
    $region36: #{tpu_custom_call.1} parent=1 // pred_region
      %88 = dma.done [#allocation9], 6144
    $region37: #{tpu_custom_call.1} parent=1 // pred_fallthru
      _
    // Predicated region
    $region38: #{tpu_custom_call.1} parent=1 // pred_check
      _
    $region39: #{tpu_custom_call.1} parent=1 // pred_check_branch
      %90 = sbr.rel (0) target = $region41
    $region40: #{tpu_custom_call.1} parent=1 // pred_region
      %92 = dma.done [#allocation9], 16
    $region41: #{tpu_custom_call.1} parent=1 // pred_fallthru
      _
    %v93 = vld [vmem:[#allocation2] sm:$0xff]
    %v94 = vld [vmem:[#allocation2 + $0x8] sm:$0xf]
    %97 = vst [vmem:[#allocation1] ss:$4 sm:$0xff] %v93
    %s98 = scalar_lea.vmem [#allocation1], 32
    %99 = vst [vmem:[%s98] ss:$4 sm:$0xff] %v94
    %v100 = vld.sshfl [vmem:[#allocation1] sm:$0xff pattern:$0x73625140]
    %v101 = vld.sshfl [vmem:[#allocation1 + $0x8] sm:$0xff pattern:$0x73625140]
    %v102 = vld.sshfl [vmem:[#allocation1 + $0x10] sm:$0xff pattern:$0x73625140]
    %v103 = vld.sshfl [vmem:[#allocation1 + $0x18] sm:$0xff pattern:$0x73625140]
    %v104 = vld.sshfl [vmem:[#allocation1 + $0x20] sm:$0xff pattern:$0x73625140]
    %v105 = vld.sshfl [vmem:[#allocation1 + $0x28] sm:$0xff pattern:$0x73625140]
    %v112 = vpack.c.bf16 %v100, %v100
    %v113 = vpack.c.bf16 %v101, %v101
    %v114 = vpack.c.bf16 %v102, %v102
    %v115 = vpack.c.bf16 %v103, %v103
    %v116 = vpack.c.bf16 %v104, %v104
    %v117 = vpack.c.bf16 %v105, %v105
    %v118 = vld [vmem:[#allocation5] sm:$0xff]
    %v119 = vld [vmem:[#allocation5 + $0x8] sm:$0xff]
    %v120 = vld [vmem:[#allocation5 + $0x10] sm:$0xff]
    %v121 = vld [vmem:[#allocation5 + $0x18] sm:$0xff]
    %v122 = vld [vmem:[#allocation5 + $0x20] sm:$0xff]
    %v123 = vld [vmem:[#allocation5 + $0x28] sm:$0xff]
    %v124 = vld [vmem:[#allocation5 + $0x30] sm:$0xff]
    %v125 = vld [vmem:[#allocation5 + $0x38] sm:$0xff]
    %v126 = vld [vmem:[#allocation5 + $0x40] sm:$0xff]
    %v127 = vld [vmem:[#allocation5 + $0x48] sm:$0xff]
    %v128 = vld [vmem:[#allocation5 + $0x50] sm:$0xff]
    %v129 = vld [vmem:[#allocation5 + $0x58] sm:$0xff]
    %v130 = vld [vmem:[#allocation5 + $0x60] sm:$0xff]
    %v131 = vld [vmem:[#allocation5 + $0x68] sm:$0xff]
    %v132 = vld [vmem:[#allocation5 + $0x70] sm:$0xff]
    %v133 = vld [vmem:[#allocation5 + $0x78] sm:$0xff]
    %v134 = vld [vmem:[#allocation5 + $0x80] sm:$0xff]
    %v135 = vld [vmem:[#allocation5 + $0x88] sm:$0xff]
    %v136 = vld [vmem:[#allocation5 + $0x90] sm:$0xff]
    %v137 = vld [vmem:[#allocation5 + $0x98] sm:$0xff]
    %v138 = vld [vmem:[#allocation5 + $0xa0] sm:$0xff]
    %v139 = vld [vmem:[#allocation5 + $0xa8] sm:$0xff]
    %v140 = vld [vmem:[#allocation5 + $0xb0] sm:$0xff]
    %v141 = vld [vmem:[#allocation5 + $0xb8] sm:$0xff]
    %v142 = vld [vmem:[#allocation5 + $0xc0] sm:$0xff]
    %v143 = vld [vmem:[#allocation5 + $0xc8] sm:$0xff]
    %v144 = vld [vmem:[#allocation5 + $0xd0] sm:$0xff]
    %v145 = vld [vmem:[#allocation5 + $0xd8] sm:$0xff]
    %v146 = vld [vmem:[#allocation5 + $0xe0] sm:$0xff]
    %v147 = vld [vmem:[#allocation5 + $0xe8] sm:$0xff]
    %v148 = vld [vmem:[#allocation5 + $0xf0] sm:$0xff]
    %v149 = vld [vmem:[#allocation5 + $0xf8] sm:$0xff]
    %v150 = vld [vmem:[#allocation5 + $0x100] sm:$0xff]
    %v151 = vld [vmem:[#allocation5 + $0x108] sm:$0xff]
    %v152 = vld [vmem:[#allocation5 + $0x110] sm:$0xff]
    %v153 = vld [vmem:[#allocation5 + $0x118] sm:$0xff]
    %v154 = vld [vmem:[#allocation5 + $0x120] sm:$0xff]
    %v155 = vld [vmem:[#allocation5 + $0x128] sm:$0xff]
    %v156 = vld [vmem:[#allocation5 + $0x130] sm:$0xff]
    %v157 = vld [vmem:[#allocation5 + $0x138] sm:$0xff]
    %v158 = vld [vmem:[#allocation5 + $0x140] sm:$0xff]
    %v159 = vld [vmem:[#allocation5 + $0x148] sm:$0xff]
    %v160 = vld [vmem:[#allocation5 + $0x150] sm:$0xff]
    %v161 = vld [vmem:[#allocation5 + $0x158] sm:$0xff]
    %v162 = vld [vmem:[#allocation5 + $0x160] sm:$0xff]
    %v163 = vld [vmem:[#allocation5 + $0x168] sm:$0xff]
    %v164 = vld [vmem:[#allocation5 + $0x170] sm:$0xff]
    %v165 = vld [vmem:[#allocation5 + $0x178] sm:$0xff]
    %v166 = vld [vmem:[#allocation5 + $0x180] sm:$0xff]
    %v167 = vld [vmem:[#allocation5 + $0x188] sm:$0xff]
    %v168 = vld [vmem:[#allocation5 + $0x190] sm:$0xff]
    %v169 = vld [vmem:[#allocation5 + $0x198] sm:$0xff]
    %v170 = vld [vmem:[#allocation5 + $0x1a0] sm:$0xff]
    %v171 = vld [vmem:[#allocation5 + $0x1a8] sm:$0xff]
    %v172 = vld [vmem:[#allocation5 + $0x1b0] sm:$0xff]
    %v173 = vld [vmem:[#allocation5 + $0x1b8] sm:$0xff]
    %v174 = vld [vmem:[#allocation5 + $0x1c0] sm:$0xff]
    %v175 = vld [vmem:[#allocation5 + $0x1c8] sm:$0xff]
    %v176 = vld [vmem:[#allocation5 + $0x1d0] sm:$0xff]
    %v177 = vld [vmem:[#allocation5 + $0x1d8] sm:$0xff]
    %v178 = vld [vmem:[#allocation5 + $0x1e0] sm:$0xff]
    %v179 = vld [vmem:[#allocation5 + $0x1e8] sm:$0xff]
    %v180 = vld [vmem:[#allocation5 + $0x1f0] sm:$0xff]
    %v181 = vld [vmem:[#allocation5 + $0x1f8] sm:$0xff]
    %v182 = vld [vmem:[#allocation5 + $0x200] sm:$0xff]
    %v183 = vld [vmem:[#allocation5 + $0x208] sm:$0xff]
    %v184 = vld [vmem:[#allocation5 + $0x210] sm:$0xff]
    %v185 = vld [vmem:[#allocation5 + $0x218] sm:$0xff]
    %v186 = vld [vmem:[#allocation5 + $0x220] sm:$0xff]
    %v187 = vld [vmem:[#allocation5 + $0x228] sm:$0xff]
    %v188 = vld [vmem:[#allocation5 + $0x230] sm:$0xff]
    %v189 = vld [vmem:[#allocation5 + $0x238] sm:$0xff]
    %v190 = vld [vmem:[#allocation5 + $0x240] sm:$0xff]
    %v191 = vld [vmem:[#allocation5 + $0x248] sm:$0xff]
    %v192 = vld [vmem:[#allocation5 + $0x250] sm:$0xff]
    %v193 = vld [vmem:[#allocation5 + $0x258] sm:$0xff]
    %v194 = vld [vmem:[#allocation5 + $0x260] sm:$0xff]
    %v195 = vld [vmem:[#allocation5 + $0x268] sm:$0xff]
    %v196 = vld [vmem:[#allocation5 + $0x270] sm:$0xff]
    %v197 = vld [vmem:[#allocation5 + $0x278] sm:$0xff]
    %v198 = vld [vmem:[#allocation5 + $0x280] sm:$0xff]
    %v199 = vld [vmem:[#allocation5 + $0x288] sm:$0xff]
    %v200 = vld [vmem:[#allocation5 + $0x290] sm:$0xff]
    %v201 = vld [vmem:[#allocation5 + $0x298] sm:$0xff]
    %v202 = vld [vmem:[#allocation5 + $0x2a0] sm:$0xff]
    %v203 = vld [vmem:[#allocation5 + $0x2a8] sm:$0xff]
    %v204 = vld [vmem:[#allocation5 + $0x2b0] sm:$0xff]
    %v205 = vld [vmem:[#allocation5 + $0x2b8] sm:$0xff]
    %v206 = vld [vmem:[#allocation5 + $0x2c0] sm:$0xff]
    %v207 = vld [vmem:[#allocation5 + $0x2c8] sm:$0xff]
    %v208 = vld [vmem:[#allocation5 + $0x2d0] sm:$0xff]
    %v209 = vld [vmem:[#allocation5 + $0x2d8] sm:$0xff]
    %v210 = vld [vmem:[#allocation5 + $0x2e0] sm:$0xff]
    %v211 = vld [vmem:[#allocation5 + $0x2e8] sm:$0xff]
    %v212 = vld [vmem:[#allocation5 + $0x2f0] sm:$0xff]
    %v213 = vld [vmem:[#allocation5 + $0x2f8] sm:$0xff]
    %v214 = vld [vmem:[#allocation5 + $0x300] sm:$0xff]
    %v215 = vld [vmem:[#allocation5 + $0x308] sm:$0xff]
    %v216 = vld [vmem:[#allocation5 + $0x310] sm:$0xff]
    %v217 = vld [vmem:[#allocation5 + $0x318] sm:$0xff]
    %v218 = vld [vmem:[#allocation5 + $0x320] sm:$0xff]
    %v219 = vld [vmem:[#allocation5 + $0x328] sm:$0xff]
    %v220 = vld [vmem:[#allocation5 + $0x330] sm:$0xff]
    %v221 = vld [vmem:[#allocation5 + $0x338] sm:$0xff]
    %v222 = vld [vmem:[#allocation5 + $0x340] sm:$0xff]
    %v223 = vld [vmem:[#allocation5 + $0x348] sm:$0xff]
    %v224 = vld [vmem:[#allocation5 + $0x350] sm:$0xff]
    %v225 = vld [vmem:[#allocation5 + $0x358] sm:$0xff]
    %v226 = vld [vmem:[#allocation5 + $0x360] sm:$0xff]
    %v227 = vld [vmem:[#allocation5 + $0x368] sm:$0xff]
    %v228 = vld [vmem:[#allocation5 + $0x370] sm:$0xff]
    %v229 = vld [vmem:[#allocation5 + $0x378] sm:$0xff]
    %v230 = vld [vmem:[#allocation5 + $0x380] sm:$0xff]
    %v231 = vld [vmem:[#allocation5 + $0x388] sm:$0xff]
    %v232 = vld [vmem:[#allocation5 + $0x390] sm:$0xff]
    %v233 = vld [vmem:[#allocation5 + $0x398] sm:$0xff]
    %v234 = vld [vmem:[#allocation5 + $0x3a0] sm:$0xff]
    %v235 = vld [vmem:[#allocation5 + $0x3a8] sm:$0xff]
    %v236 = vld [vmem:[#allocation5 + $0x3b0] sm:$0xff]
    %v237 = vld [vmem:[#allocation5 + $0x3b8] sm:$0xff]
    %v238 = vld [vmem:[#allocation5 + $0x3c0] sm:$0xff]
    %v239 = vld [vmem:[#allocation5 + $0x3c8] sm:$0xff]
    %v240 = vld [vmem:[#allocation5 + $0x3d0] sm:$0xff]
    %v241 = vld [vmem:[#allocation5 + $0x3d8] sm:$0xff]
    %v242 = vld [vmem:[#allocation5 + $0x3e0] sm:$0xff]
    %v243 = vld [vmem:[#allocation5 + $0x3e8] sm:$0xff]
    %v244 = vld [vmem:[#allocation5 + $0x3f0] sm:$0xff]
    %v245 = vld [vmem:[#allocation5 + $0x3f8] sm:$0xff]
    %v246 = vld [vmem:[#allocation5 + $0x400] sm:$0xff]
    %v247 = vld [vmem:[#allocation5 + $0x408] sm:$0xff]
    %v248 = vld [vmem:[#allocation5 + $0x410] sm:$0xff]
    %v249 = vld [vmem:[#allocation5 + $0x418] sm:$0xff]
    %v250 = vld [vmem:[#allocation5 + $0x420] sm:$0xff]
    %v251 = vld [vmem:[#allocation5 + $0x428] sm:$0xff]
    %v252 = vld [vmem:[#allocation5 + $0x430] sm:$0xff]
    %v253 = vld [vmem:[#allocation5 + $0x438] sm:$0xff]
    %v254 = vld [vmem:[#allocation5 + $0x440] sm:$0xff]
    %v255 = vld [vmem:[#allocation5 + $0x448] sm:$0xff]
    %v256 = vld [vmem:[#allocation5 + $0x450] sm:$0xff]
    %v257 = vld [vmem:[#allocation5 + $0x458] sm:$0xff]
    %v258 = vld [vmem:[#allocation5 + $0x460] sm:$0xff]
    %v259 = vld [vmem:[#allocation5 + $0x468] sm:$0xff]
    %v260 = vld [vmem:[#allocation5 + $0x470] sm:$0xff]
    %v261 = vld [vmem:[#allocation5 + $0x478] sm:$0xff]
    %v262 = vld [vmem:[#allocation5 + $0x480] sm:$0xff]
    %v263 = vld [vmem:[#allocation5 + $0x488] sm:$0xff]
    %v264 = vld [vmem:[#allocation5 + $0x490] sm:$0xff]
    %v265 = vld [vmem:[#allocation5 + $0x498] sm:$0xff]
    %v266 = vld [vmem:[#allocation5 + $0x4a0] sm:$0xff]
    %v267 = vld [vmem:[#allocation5 + $0x4a8] sm:$0xff]
    %v268 = vld [vmem:[#allocation5 + $0x4b0] sm:$0xff]
    %v269 = vld [vmem:[#allocation5 + $0x4b8] sm:$0xff]
    %v270 = vld [vmem:[#allocation5 + $0x4c0] sm:$0xff]
    %v271 = vld [vmem:[#allocation5 + $0x4c8] sm:$0xff]
    %v272 = vld [vmem:[#allocation5 + $0x4d0] sm:$0xff]
    %v273 = vld [vmem:[#allocation5 + $0x4d8] sm:$0xff]
    %v274 = vld [vmem:[#allocation5 + $0x4e0] sm:$0xff]
    %v275 = vld [vmem:[#allocation5 + $0x4e8] sm:$0xff]
    %v276 = vld [vmem:[#allocation5 + $0x4f0] sm:$0xff]
    %v277 = vld [vmem:[#allocation5 + $0x4f8] sm:$0xff]
    %v278 = vld [vmem:[#allocation5 + $0x500] sm:$0xff]
    %v279 = vld [vmem:[#allocation5 + $0x508] sm:$0xff]
    %v280 = vld [vmem:[#allocation5 + $0x510] sm:$0xff]
    %v281 = vld [vmem:[#allocation5 + $0x518] sm:$0xff]
    %v282 = vld [vmem:[#allocation5 + $0x520] sm:$0xff]
    %v283 = vld [vmem:[#allocation5 + $0x528] sm:$0xff]
    %v284 = vld [vmem:[#allocation5 + $0x530] sm:$0xff]
    %v285 = vld [vmem:[#allocation5 + $0x538] sm:$0xff]
    %v286 = vld [vmem:[#allocation5 + $0x540] sm:$0xff]
    %v287 = vld [vmem:[#allocation5 + $0x548] sm:$0xff]
    %v288 = vld [vmem:[#allocation5 + $0x550] sm:$0xff]
    %v289 = vld [vmem:[#allocation5 + $0x558] sm:$0xff]
    %v290 = vld [vmem:[#allocation5 + $0x560] sm:$0xff]
    %v291 = vld [vmem:[#allocation5 + $0x568] sm:$0xff]
    %v292 = vld [vmem:[#allocation5 + $0x570] sm:$0xff]
    %v293 = vld [vmem:[#allocation5 + $0x578] sm:$0xff]
    %v294 = vld [vmem:[#allocation5 + $0x580] sm:$0xff]
    %v295 = vld [vmem:[#allocation5 + $0x588] sm:$0xff]
    %v296 = vld [vmem:[#allocation5 + $0x590] sm:$0xff]
    %v297 = vld [vmem:[#allocation5 + $0x598] sm:$0xff]
    %v298 = vld [vmem:[#allocation5 + $0x5a0] sm:$0xff]
    %v299 = vld [vmem:[#allocation5 + $0x5a8] sm:$0xff]
    %v300 = vld [vmem:[#allocation5 + $0x5b0] sm:$0xff]
    %v301 = vld [vmem:[#allocation5 + $0x5b8] sm:$0xff]
    %v302 = vld [vmem:[#allocation5 + $0x5c0] sm:$0xff]
    %v303 = vld [vmem:[#allocation5 + $0x5c8] sm:$0xff]
    %v304 = vld [vmem:[#allocation5 + $0x5d0] sm:$0xff]
    %v305 = vld [vmem:[#allocation5 + $0x5d8] sm:$0xff]
    %v306 = vld [vmem:[#allocation5 + $0x5e0] sm:$0xff]
    %v307 = vld [vmem:[#allocation5 + $0x5e8] sm:$0xff]
    %v308 = vld [vmem:[#allocation5 + $0x5f0] sm:$0xff]
    %v309 = vld [vmem:[#allocation5 + $0x5f8] sm:$0xff]
    %v310 = vld [vmem:[#allocation5 + $0x600] sm:$0xff]
    %v311 = vld [vmem:[#allocation5 + $0x608] sm:$0xff]
    %v312 = vld [vmem:[#allocation5 + $0x610] sm:$0xff]
    %v313 = vld [vmem:[#allocation5 + $0x618] sm:$0xff]
    %v314 = vld [vmem:[#allocation5 + $0x620] sm:$0xff]
    %v315 = vld [vmem:[#allocation5 + $0x628] sm:$0xff]
    %v316 = vld [vmem:[#allocation5 + $0x630] sm:$0xff]
    %v317 = vld [vmem:[#allocation5 + $0x638] sm:$0xff]
    %v318 = vld [vmem:[#allocation5 + $0x640] sm:$0xff]
    %v319 = vld [vmem:[#allocation5 + $0x648] sm:$0xff]
    %v320 = vld [vmem:[#allocation5 + $0x650] sm:$0xff]
    %v321 = vld [vmem:[#allocation5 + $0x658] sm:$0xff]
    %v322 = vld [vmem:[#allocation5 + $0x660] sm:$0xff]
    %v323 = vld [vmem:[#allocation5 + $0x668] sm:$0xff]
    %v324 = vld [vmem:[#allocation5 + $0x670] sm:$0xff]
    %v325 = vld [vmem:[#allocation5 + $0x678] sm:$0xff]
    %v326 = vld [vmem:[#allocation5 + $0x680] sm:$0xff]
    %v327 = vld [vmem:[#allocation5 + $0x688] sm:$0xff]
    %v328 = vld [vmem:[#allocation5 + $0x690] sm:$0xff]
    %v329 = vld [vmem:[#allocation5 + $0x698] sm:$0xff]
    %v330 = vld [vmem:[#allocation5 + $0x6a0] sm:$0xff]
    %v331 = vld [vmem:[#allocation5 + $0x6a8] sm:$0xff]
    %v332 = vld [vmem:[#allocation5 + $0x6b0] sm:$0xff]
    %v333 = vld [vmem:[#allocation5 + $0x6b8] sm:$0xff]
    %v334 = vld [vmem:[#allocation5 + $0x6c0] sm:$0xff]
    %v335 = vld [vmem:[#allocation5 + $0x6c8] sm:$0xff]
    %v336 = vld [vmem:[#allocation5 + $0x6d0] sm:$0xff]
    %v337 = vld [vmem:[#allocation5 + $0x6d8] sm:$0xff]
    %v338 = vld [vmem:[#allocation5 + $0x6e0] sm:$0xff]
    %v339 = vld [vmem:[#allocation5 + $0x6e8] sm:$0xff]
    %v340 = vld [vmem:[#allocation5 + $0x6f0] sm:$0xff]
    %v341 = vld [vmem:[#allocation5 + $0x6f8] sm:$0xff]
    %v342 = vld [vmem:[#allocation5 + $0x700] sm:$0xff]
    %v343 = vld [vmem:[#allocation5 + $0x708] sm:$0xff]
    %v344 = vld [vmem:[#allocation5 + $0x710] sm:$0xff]
    %v345 = vld [vmem:[#allocation5 + $0x718] sm:$0xff]
    %v346 = vld [vmem:[#allocation5 + $0x720] sm:$0xff]
    %v347 = vld [vmem:[#allocation5 + $0x728] sm:$0xff]
    %v348 = vld [vmem:[#allocation5 + $0x730] sm:$0xff]
    %v349 = vld [vmem:[#allocation5 + $0x738] sm:$0xff]
    %v350 = vld [vmem:[#allocation5 + $0x740] sm:$0xff]
    %v351 = vld [vmem:[#allocation5 + $0x748] sm:$0xff]
    %v352 = vld [vmem:[#allocation5 + $0x750] sm:$0xff]
    %v353 = vld [vmem:[#allocation5 + $0x758] sm:$0xff]
    %v354 = vld [vmem:[#allocation5 + $0x760] sm:$0xff]
    %v355 = vld [vmem:[#allocation5 + $0x768] sm:$0xff]
    %v356 = vld [vmem:[#allocation5 + $0x770] sm:$0xff]
    %v357 = vld [vmem:[#allocation5 + $0x778] sm:$0xff]
    %v358 = vld [vmem:[#allocation5 + $0x780] sm:$0xff]
    %v359 = vld [vmem:[#allocation5 + $0x788] sm:$0xff]
    %v360 = vld [vmem:[#allocation5 + $0x790] sm:$0xff]
    %v361 = vld [vmem:[#allocation5 + $0x798] sm:$0xff]
    %v362 = vld [vmem:[#allocation5 + $0x7a0] sm:$0xff]
    %v363 = vld [vmem:[#allocation5 + $0x7a8] sm:$0xff]
    %v364 = vld [vmem:[#allocation5 + $0x7b0] sm:$0xff]
    %v365 = vld [vmem:[#allocation5 + $0x7b8] sm:$0xff]
    %v366 = vld [vmem:[#allocation5 + $0x7c0] sm:$0xff]
    %v367 = vld [vmem:[#allocation5 + $0x7c8] sm:$0xff]
    %v368 = vld [vmem:[#allocation5 + $0x7d0] sm:$0xff]
    %v369 = vld [vmem:[#allocation5 + $0x7d8] sm:$0xff]
    %v370 = vld [vmem:[#allocation5 + $0x7e0] sm:$0xff]
    %v371 = vld [vmem:[#allocation5 + $0x7e8] sm:$0xff]
    %v372 = vld [vmem:[#allocation5 + $0x7f0] sm:$0xff]
    %v373 = vld [vmem:[#allocation5 + $0x7f8] sm:$0xff]
    %v374 = vld [vmem:[#allocation5 + $0x800] sm:$0xff]
    %v375 = vld [vmem:[#allocation5 + $0x808] sm:$0xff]
    %v376 = vld [vmem:[#allocation5 + $0x810] sm:$0xff]
    %v377 = vld [vmem:[#allocation5 + $0x818] sm:$0xff]
    %v378 = vld [vmem:[#allocation5 + $0x820] sm:$0xff]
    %v379 = vld [vmem:[#allocation5 + $0x828] sm:$0xff]
    %v380 = vld [vmem:[#allocation5 + $0x830] sm:$0xff]
    %v381 = vld [vmem:[#allocation5 + $0x838] sm:$0xff]
    %v382 = vld [vmem:[#allocation5 + $0x840] sm:$0xff]
    %v383 = vld [vmem:[#allocation5 + $0x848] sm:$0xff]
    %v384 = vld [vmem:[#allocation5 + $0x850] sm:$0xff]
    %v385 = vld [vmem:[#allocation5 + $0x858] sm:$0xff]
    %v386 = vld [vmem:[#allocation5 + $0x860] sm:$0xff]
    %v387 = vld [vmem:[#allocation5 + $0x868] sm:$0xff]
    %v388 = vld [vmem:[#allocation5 + $0x870] sm:$0xff]
    %v389 = vld [vmem:[#allocation5 + $0x878] sm:$0xff]
    %v390 = vld [vmem:[#allocation5 + $0x880] sm:$0xff]
    %v391 = vld [vmem:[#allocation5 + $0x888] sm:$0xff]
    %v392 = vld [vmem:[#allocation5 + $0x890] sm:$0xff]
    %v393 = vld [vmem:[#allocation5 + $0x898] sm:$0xff]
    %v394 = vld [vmem:[#allocation5 + $0x8a0] sm:$0xff]
    %v395 = vld [vmem:[#allocation5 + $0x8a8] sm:$0xff]
    %v396 = vld [vmem:[#allocation5 + $0x8b0] sm:$0xff]
    %v397 = vld [vmem:[#allocation5 + $0x8b8] sm:$0xff]
    %v398 = vld [vmem:[#allocation5 + $0x8c0] sm:$0xff]
    %v399 = vld [vmem:[#allocation5 + $0x8c8] sm:$0xff]
    %v400 = vld [vmem:[#allocation5 + $0x8d0] sm:$0xff]
    %v401 = vld [vmem:[#allocation5 + $0x8d8] sm:$0xff]
    %v402 = vld [vmem:[#allocation5 + $0x8e0] sm:$0xff]
    %v403 = vld [vmem:[#allocation5 + $0x8e8] sm:$0xff]
    %v404 = vld [vmem:[#allocation5 + $0x8f0] sm:$0xff]
    %v405 = vld [vmem:[#allocation5 + $0x8f8] sm:$0xff]
    %v406 = vld [vmem:[#allocation7] sm:$0x3f]
    %v408 = vperm.slane %v406, 0
    %v409 = vperm.slane %v406, 1
    %v410 = vperm.slane %v406, 2
    %v411 = vperm.slane %v406, 3
    %v412 = vperm.slane %v406, 4
    %v413 = vperm.slane %v406, 5
    %v708 = vunpack.c.l.b16 %v118
    %v709 = vunpack.c.h.b16 %v118
    %v710 = vunpack.c.l.b16 %v119
    %v711 = vunpack.c.h.b16 %v119
    %v712 = vunpack.c.l.b16 %v120
    %v713 = vunpack.c.h.b16 %v120
    %v714 = vunpack.c.l.b16 %v121
    %v715 = vunpack.c.h.b16 %v121
    %v716 = vunpack.c.l.b16 %v122
    %v717 = vunpack.c.h.b16 %v122
    %v718 = vunpack.c.l.b16 %v123
    %v719 = vunpack.c.h.b16 %v123
    %v720 = vunpack.c.l.b16 %v124
    %v721 = vunpack.c.h.b16 %v124
    %v722 = vunpack.c.l.b16 %v125
    %v723 = vunpack.c.h.b16 %v125
    %v724 = vunpack.c.l.b16 %v126
    %v725 = vunpack.c.h.b16 %v126
    %v726 = vunpack.c.l.b16 %v127
    %v727 = vunpack.c.h.b16 %v127
    %v728 = vunpack.c.l.b16 %v128
    %v729 = vunpack.c.h.b16 %v128
    %v730 = vunpack.c.l.b16 %v129
    %v731 = vunpack.c.h.b16 %v129
    %v732 = vunpack.c.l.b16 %v130
    %v733 = vunpack.c.h.b16 %v130
    %v734 = vunpack.c.l.b16 %v131
    %v735 = vunpack.c.h.b16 %v131
    %v736 = vunpack.c.l.b16 %v132
    %v737 = vunpack.c.h.b16 %v132
    %v738 = vunpack.c.l.b16 %v133
    %v739 = vunpack.c.h.b16 %v133
    %v740 = vunpack.c.l.b16 %v134
    %v741 = vunpack.c.h.b16 %v134
    %v742 = vunpack.c.l.b16 %v135
    %v743 = vunpack.c.h.b16 %v135
    %v744 = vunpack.c.l.b16 %v136
    %v745 = vunpack.c.h.b16 %v136
    %v746 = vunpack.c.l.b16 %v137
    %v747 = vunpack.c.h.b16 %v137
    %v748 = vunpack.c.l.b16 %v138
    %v749 = vunpack.c.h.b16 %v138
    %v750 = vunpack.c.l.b16 %v139
    %v751 = vunpack.c.h.b16 %v139
    %v752 = vunpack.c.l.b16 %v140
    %v753 = vunpack.c.h.b16 %v140
    %v754 = vunpack.c.l.b16 %v141
    %v755 = vunpack.c.h.b16 %v141
    %v756 = vunpack.c.l.b16 %v142
    %v757 = vunpack.c.h.b16 %v142
    %v758 = vunpack.c.l.b16 %v143
    %v759 = vunpack.c.h.b16 %v143
    %v760 = vunpack.c.l.b16 %v144
    %v761 = vunpack.c.h.b16 %v144
    %v762 = vunpack.c.l.b16 %v145
    %v763 = vunpack.c.h.b16 %v145
    %v764 = vunpack.c.l.b16 %v146
    %v765 = vunpack.c.h.b16 %v146
    %v766 = vunpack.c.l.b16 %v147
    %v767 = vunpack.c.h.b16 %v147
    %v768 = vunpack.c.l.b16 %v148
    %v769 = vunpack.c.h.b16 %v148
    %v770 = vunpack.c.l.b16 %v149
    %v771 = vunpack.c.h.b16 %v149
    %v772 = vunpack.c.l.b16 %v150
    %v773 = vunpack.c.h.b16 %v150
    %v774 = vunpack.c.l.b16 %v151
    %v775 = vunpack.c.h.b16 %v151
    %v776 = vunpack.c.l.b16 %v152
    %v777 = vunpack.c.h.b16 %v152
    %v778 = vunpack.c.l.b16 %v153
    %v779 = vunpack.c.h.b16 %v153
    %v780 = vunpack.c.l.b16 %v154
    %v781 = vunpack.c.h.b16 %v154
    %v782 = vunpack.c.l.b16 %v155
    %v783 = vunpack.c.h.b16 %v155
    %v784 = vunpack.c.l.b16 %v156
    %v785 = vunpack.c.h.b16 %v156
    %v786 = vunpack.c.l.b16 %v157
    %v787 = vunpack.c.h.b16 %v157
    %v788 = vunpack.c.l.b16 %v158
    %v789 = vunpack.c.h.b16 %v158
    %v790 = vunpack.c.l.b16 %v159
    %v791 = vunpack.c.h.b16 %v159
    %v792 = vunpack.c.l.b16 %v160
    %v793 = vunpack.c.h.b16 %v160
    %v794 = vunpack.c.l.b16 %v161
    %v795 = vunpack.c.h.b16 %v161
    %v796 = vunpack.c.l.b16 %v162
    %v797 = vunpack.c.h.b16 %v162
    %v798 = vunpack.c.l.b16 %v163
    %v799 = vunpack.c.h.b16 %v163
    %v800 = vunpack.c.l.b16 %v164
    %v801 = vunpack.c.h.b16 %v164
    %v802 = vunpack.c.l.b16 %v165
    %v803 = vunpack.c.h.b16 %v165
    %v804 = vunpack.c.l.b16 %v166
    %v805 = vunpack.c.h.b16 %v166
    %v806 = vunpack.c.l.b16 %v167
    %v807 = vunpack.c.h.b16 %v167
    %v808 = vunpack.c.l.b16 %v168
    %v809 = vunpack.c.h.b16 %v168
    %v810 = vunpack.c.l.b16 %v169
    %v811 = vunpack.c.h.b16 %v169
    %v812 = vunpack.c.l.b16 %v170
    %v813 = vunpack.c.h.b16 %v170
    %v814 = vunpack.c.l.b16 %v171
    %v815 = vunpack.c.h.b16 %v171
    %v816 = vunpack.c.l.b16 %v172
    %v817 = vunpack.c.h.b16 %v172
    %v818 = vunpack.c.l.b16 %v173
    %v819 = vunpack.c.h.b16 %v173
    %v820 = vunpack.c.l.b16 %v174
    %v821 = vunpack.c.h.b16 %v174
    %v822 = vunpack.c.l.b16 %v175
    %v823 = vunpack.c.h.b16 %v175
    %v824 = vunpack.c.l.b16 %v176
    %v825 = vunpack.c.h.b16 %v176
    %v826 = vunpack.c.l.b16 %v177
    %v827 = vunpack.c.h.b16 %v177
    %v828 = vunpack.c.l.b16 %v178
    %v829 = vunpack.c.h.b16 %v178
    %v830 = vunpack.c.l.b16 %v179
    %v831 = vunpack.c.h.b16 %v179
    %v832 = vunpack.c.l.b16 %v180
    %v833 = vunpack.c.h.b16 %v180
    %v834 = vunpack.c.l.b16 %v181
    %v835 = vunpack.c.h.b16 %v181
    %v836 = vunpack.c.l.b16 %v182
    %v837 = vunpack.c.h.b16 %v182
    %v838 = vunpack.c.l.b16 %v183
    %v839 = vunpack.c.h.b16 %v183
    %v840 = vunpack.c.l.b16 %v184
    %v841 = vunpack.c.h.b16 %v184
    %v842 = vunpack.c.l.b16 %v185
    %v843 = vunpack.c.h.b16 %v185
    %v844 = vunpack.c.l.b16 %v186
    %v845 = vunpack.c.h.b16 %v186
    %v846 = vunpack.c.l.b16 %v187
    %v847 = vunpack.c.h.b16 %v187
    %v848 = vunpack.c.l.b16 %v188
    %v849 = vunpack.c.h.b16 %v188
    %v850 = vunpack.c.l.b16 %v189
    %v851 = vunpack.c.h.b16 %v189
    %v852 = vunpack.c.l.b16 %v190
    %v853 = vunpack.c.h.b16 %v190
    %v854 = vunpack.c.l.b16 %v191
    %v855 = vunpack.c.h.b16 %v191
    %v856 = vunpack.c.l.b16 %v192
    %v857 = vunpack.c.h.b16 %v192
    %v858 = vunpack.c.l.b16 %v193
    %v859 = vunpack.c.h.b16 %v193
    %v860 = vunpack.c.l.b16 %v194
    %v861 = vunpack.c.h.b16 %v194
    %v862 = vunpack.c.l.b16 %v195
    %v863 = vunpack.c.h.b16 %v195
    %v864 = vunpack.c.l.b16 %v196
    %v865 = vunpack.c.h.b16 %v196
    %v866 = vunpack.c.l.b16 %v197
    %v867 = vunpack.c.h.b16 %v197
    %v868 = vunpack.c.l.b16 %v198
    %v869 = vunpack.c.h.b16 %v198
    %v870 = vunpack.c.l.b16 %v199
    %v871 = vunpack.c.h.b16 %v199
    %v872 = vunpack.c.l.b16 %v200
    %v873 = vunpack.c.h.b16 %v200
    %v874 = vunpack.c.l.b16 %v201
    %v875 = vunpack.c.h.b16 %v201
    %v876 = vunpack.c.l.b16 %v202
    %v877 = vunpack.c.h.b16 %v202
    %v878 = vunpack.c.l.b16 %v203
    %v879 = vunpack.c.h.b16 %v203
    %v880 = vunpack.c.l.b16 %v204
    %v881 = vunpack.c.h.b16 %v204
    %v882 = vunpack.c.l.b16 %v205
    %v883 = vunpack.c.h.b16 %v205
    %v884 = vunpack.c.l.b16 %v206
    %v885 = vunpack.c.h.b16 %v206
    %v886 = vunpack.c.l.b16 %v207
    %v887 = vunpack.c.h.b16 %v207
    %v888 = vunpack.c.l.b16 %v208
    %v889 = vunpack.c.h.b16 %v208
    %v890 = vunpack.c.l.b16 %v209
    %v891 = vunpack.c.h.b16 %v209
    %v892 = vunpack.c.l.b16 %v210
    %v893 = vunpack.c.h.b16 %v210
    %v894 = vunpack.c.l.b16 %v211
    %v895 = vunpack.c.h.b16 %v211
    %v896 = vunpack.c.l.b16 %v212
    %v897 = vunpack.c.h.b16 %v212
    %v898 = vunpack.c.l.b16 %v213
    %v899 = vunpack.c.h.b16 %v213
    %v900 = vunpack.c.l.b16 %v214
    %v901 = vunpack.c.h.b16 %v214
    %v902 = vunpack.c.l.b16 %v215
    %v903 = vunpack.c.h.b16 %v215
    %v904 = vunpack.c.l.b16 %v216
    %v905 = vunpack.c.h.b16 %v216
    %v906 = vunpack.c.l.b16 %v217
    %v907 = vunpack.c.h.b16 %v217
    %v908 = vunpack.c.l.b16 %v218
    %v909 = vunpack.c.h.b16 %v218
    %v910 = vunpack.c.l.b16 %v219
    %v911 = vunpack.c.h.b16 %v219
    %v912 = vunpack.c.l.b16 %v220
    %v913 = vunpack.c.h.b16 %v220
    %v914 = vunpack.c.l.b16 %v221
    %v915 = vunpack.c.h.b16 %v221
    %v916 = vunpack.c.l.b16 %v222
    %v917 = vunpack.c.h.b16 %v222
    %v918 = vunpack.c.l.b16 %v223
    %v919 = vunpack.c.h.b16 %v223
    %v920 = vunpack.c.l.b16 %v224
    %v921 = vunpack.c.h.b16 %v224
    %v922 = vunpack.c.l.b16 %v225
    %v923 = vunpack.c.h.b16 %v225
    %v924 = vunpack.c.l.b16 %v226
    %v925 = vunpack.c.h.b16 %v226
    %v926 = vunpack.c.l.b16 %v227
    %v927 = vunpack.c.h.b16 %v227
    %v928 = vunpack.c.l.b16 %v228
    %v929 = vunpack.c.h.b16 %v228
    %v930 = vunpack.c.l.b16 %v229
    %v931 = vunpack.c.h.b16 %v229
    %v932 = vunpack.c.l.b16 %v230
    %v933 = vunpack.c.h.b16 %v230
    %v934 = vunpack.c.l.b16 %v231
    %v935 = vunpack.c.h.b16 %v231
    %v936 = vunpack.c.l.b16 %v232
    %v937 = vunpack.c.h.b16 %v232
    %v938 = vunpack.c.l.b16 %v233
    %v939 = vunpack.c.h.b16 %v233
    %v940 = vunpack.c.l.b16 %v234
    %v941 = vunpack.c.h.b16 %v234
    %v942 = vunpack.c.l.b16 %v235
    %v943 = vunpack.c.h.b16 %v235
    %v944 = vunpack.c.l.b16 %v236
    %v945 = vunpack.c.h.b16 %v236
    %v946 = vunpack.c.l.b16 %v237
    %v947 = vunpack.c.h.b16 %v237
    %v948 = vunpack.c.l.b16 %v238
    %v949 = vunpack.c.h.b16 %v238
    %v950 = vunpack.c.l.b16 %v239
    %v951 = vunpack.c.h.b16 %v239
    %v952 = vunpack.c.l.b16 %v240
    %v953 = vunpack.c.h.b16 %v240
    %v954 = vunpack.c.l.b16 %v241
    %v955 = vunpack.c.h.b16 %v241
    %v956 = vunpack.c.l.b16 %v242
    %v957 = vunpack.c.h.b16 %v242
    %v958 = vunpack.c.l.b16 %v243
    %v959 = vunpack.c.h.b16 %v243
    %v960 = vunpack.c.l.b16 %v244
    %v961 = vunpack.c.h.b16 %v244
    %v962 = vunpack.c.l.b16 %v245
    %v963 = vunpack.c.h.b16 %v245
    %v964 = vunpack.c.l.b16 %v246
    %v965 = vunpack.c.h.b16 %v246
    %v966 = vunpack.c.l.b16 %v247
    %v967 = vunpack.c.h.b16 %v247
    %v968 = vunpack.c.l.b16 %v248
    %v969 = vunpack.c.h.b16 %v248
    %v970 = vunpack.c.l.b16 %v249
    %v971 = vunpack.c.h.b16 %v249
    %v972 = vunpack.c.l.b16 %v250
    %v973 = vunpack.c.h.b16 %v250
    %v974 = vunpack.c.l.b16 %v251
    %v975 = vunpack.c.h.b16 %v251
    %v976 = vunpack.c.l.b16 %v252
    %v977 = vunpack.c.h.b16 %v252
    %v978 = vunpack.c.l.b16 %v253
    %v979 = vunpack.c.h.b16 %v253
    %v980 = vunpack.c.l.b16 %v254
    %v981 = vunpack.c.h.b16 %v254
    %v982 = vunpack.c.l.b16 %v255
    %v983 = vunpack.c.h.b16 %v255
    %v984 = vunpack.c.l.b16 %v256
    %v985 = vunpack.c.h.b16 %v256
    %v986 = vunpack.c.l.b16 %v257
    %v987 = vunpack.c.h.b16 %v257
    %v988 = vunpack.c.l.b16 %v258
    %v989 = vunpack.c.h.b16 %v258
    %v990 = vunpack.c.l.b16 %v259
    %v991 = vunpack.c.h.b16 %v259
    %v992 = vunpack.c.l.b16 %v260
    %v993 = vunpack.c.h.b16 %v260
    %v994 = vunpack.c.l.b16 %v261
    %v995 = vunpack.c.h.b16 %v261
    %v996 = vunpack.c.l.b16 %v262
    %v997 = vunpack.c.h.b16 %v262
    %v998 = vunpack.c.l.b16 %v263
    %v999 = vunpack.c.h.b16 %v263
    %v1000 = vunpack.c.l.b16 %v264
    %v1001 = vunpack.c.h.b16 %v264
    %v1002 = vunpack.c.l.b16 %v265
    %v1003 = vunpack.c.h.b16 %v265
    %v1004 = vunpack.c.l.b16 %v266
    %v1005 = vunpack.c.h.b16 %v266
    %v1006 = vunpack.c.l.b16 %v267
    %v1007 = vunpack.c.h.b16 %v267
    %v1008 = vunpack.c.l.b16 %v268
    %v1009 = vunpack.c.h.b16 %v268
    %v1010 = vunpack.c.l.b16 %v269
    %v1011 = vunpack.c.h.b16 %v269
    %v1012 = vunpack.c.l.b16 %v270
    %v1013 = vunpack.c.h.b16 %v270
    %v1014 = vunpack.c.l.b16 %v271
    %v1015 = vunpack.c.h.b16 %v271
    %v1016 = vunpack.c.l.b16 %v272
    %v1017 = vunpack.c.h.b16 %v272
    %v1018 = vunpack.c.l.b16 %v273
    %v1019 = vunpack.c.h.b16 %v273
    %v1020 = vunpack.c.l.b16 %v274
    %v1021 = vunpack.c.h.b16 %v274
    %v1022 = vunpack.c.l.b16 %v275
    %v1023 = vunpack.c.h.b16 %v275
    %v1024 = vunpack.c.l.b16 %v276
    %v1025 = vunpack.c.h.b16 %v276
    %v1026 = vunpack.c.l.b16 %v277
    %v1027 = vunpack.c.h.b16 %v277
    %v1028 = vunpack.c.l.b16 %v278
    %v1029 = vunpack.c.h.b16 %v278
    %v1030 = vunpack.c.l.b16 %v279
    %v1031 = vunpack.c.h.b16 %v279
    %v1032 = vunpack.c.l.b16 %v280
    %v1033 = vunpack.c.h.b16 %v280
    %v1034 = vunpack.c.l.b16 %v281
    %v1035 = vunpack.c.h.b16 %v281
    %v1036 = vunpack.c.l.b16 %v282
    %v1037 = vunpack.c.h.b16 %v282
    %v1038 = vunpack.c.l.b16 %v283
    %v1039 = vunpack.c.h.b16 %v283
    %v1040 = vunpack.c.l.b16 %v284
    %v1041 = vunpack.c.h.b16 %v284
    %v1042 = vunpack.c.l.b16 %v285
    %v1043 = vunpack.c.h.b16 %v285
    %v1044 = vunpack.c.l.b16 %v286
    %v1045 = vunpack.c.h.b16 %v286
    %v1046 = vunpack.c.l.b16 %v287
    %v1047 = vunpack.c.h.b16 %v287
    %v1048 = vunpack.c.l.b16 %v288
    %v1049 = vunpack.c.h.b16 %v288
    %v1050 = vunpack.c.l.b16 %v289
    %v1051 = vunpack.c.h.b16 %v289
    %v1052 = vunpack.c.l.b16 %v290
    %v1053 = vunpack.c.h.b16 %v290
    %v1054 = vunpack.c.l.b16 %v291
    %v1055 = vunpack.c.h.b16 %v291
    %v1056 = vunpack.c.l.b16 %v292
    %v1057 = vunpack.c.h.b16 %v292
    %v1058 = vunpack.c.l.b16 %v293
    %v1059 = vunpack.c.h.b16 %v293
    %v1060 = vunpack.c.l.b16 %v294
    %v1061 = vunpack.c.h.b16 %v294
    %v1062 = vunpack.c.l.b16 %v295
    %v1063 = vunpack.c.h.b16 %v295
    %v1064 = vunpack.c.l.b16 %v296
    %v1065 = vunpack.c.h.b16 %v296
    %v1066 = vunpack.c.l.b16 %v297
    %v1067 = vunpack.c.h.b16 %v297
    %v1068 = vunpack.c.l.b16 %v298
    %v1069 = vunpack.c.h.b16 %v298
    %v1070 = vunpack.c.l.b16 %v299
    %v1071 = vunpack.c.h.b16 %v299
    %v1072 = vunpack.c.l.b16 %v300
    %v1073 = vunpack.c.h.b16 %v300
    %v1074 = vunpack.c.l.b16 %v301
    %v1075 = vunpack.c.h.b16 %v301
    %v1076 = vunpack.c.l.b16 %v302
    %v1077 = vunpack.c.h.b16 %v302
    %v1078 = vunpack.c.l.b16 %v303
    %v1079 = vunpack.c.h.b16 %v303
    %v1080 = vunpack.c.l.b16 %v304
    %v1081 = vunpack.c.h.b16 %v304
    %v1082 = vunpack.c.l.b16 %v305
    %v1083 = vunpack.c.h.b16 %v305
    %v1084 = vunpack.c.l.b16 %v306
    %v1085 = vunpack.c.h.b16 %v306
    %v1086 = vunpack.c.l.b16 %v307
    %v1087 = vunpack.c.h.b16 %v307
    %v1088 = vunpack.c.l.b16 %v308
    %v1089 = vunpack.c.h.b16 %v308
    %v1090 = vunpack.c.l.b16 %v309
    %v1091 = vunpack.c.h.b16 %v309
    %v1092 = vunpack.c.l.b16 %v310
    %v1093 = vunpack.c.h.b16 %v310
    %v1094 = vunpack.c.l.b16 %v311
    %v1095 = vunpack.c.h.b16 %v311
    %v1096 = vunpack.c.l.b16 %v312
    %v1097 = vunpack.c.h.b16 %v312
    %v1098 = vunpack.c.l.b16 %v313
    %v1099 = vunpack.c.h.b16 %v313
    %v1100 = vunpack.c.l.b16 %v314
    %v1101 = vunpack.c.h.b16 %v314
    %v1102 = vunpack.c.l.b16 %v315
    %v1103 = vunpack.c.h.b16 %v315
    %v1104 = vunpack.c.l.b16 %v316
    %v1105 = vunpack.c.h.b16 %v316
    %v1106 = vunpack.c.l.b16 %v317
    %v1107 = vunpack.c.h.b16 %v317
    %v1108 = vunpack.c.l.b16 %v318
    %v1109 = vunpack.c.h.b16 %v318
    %v1110 = vunpack.c.l.b16 %v319
    %v1111 = vunpack.c.h.b16 %v319
    %v1112 = vunpack.c.l.b16 %v320
    %v1113 = vunpack.c.h.b16 %v320
    %v1114 = vunpack.c.l.b16 %v321
    %v1115 = vunpack.c.h.b16 %v321
    %v1116 = vunpack.c.l.b16 %v322
    %v1117 = vunpack.c.h.b16 %v322
    %v1118 = vunpack.c.l.b16 %v323
    %v1119 = vunpack.c.h.b16 %v323
    %v1120 = vunpack.c.l.b16 %v324
    %v1121 = vunpack.c.h.b16 %v324
    %v1122 = vunpack.c.l.b16 %v325
    %v1123 = vunpack.c.h.b16 %v325
    %v1124 = vunpack.c.l.b16 %v326
    %v1125 = vunpack.c.h.b16 %v326
    %v1126 = vunpack.c.l.b16 %v327
    %v1127 = vunpack.c.h.b16 %v327
    %v1128 = vunpack.c.l.b16 %v328
    %v1129 = vunpack.c.h.b16 %v328
    %v1130 = vunpack.c.l.b16 %v329
    %v1131 = vunpack.c.h.b16 %v329
    %v1132 = vunpack.c.l.b16 %v330
    %v1133 = vunpack.c.h.b16 %v330
    %v1134 = vunpack.c.l.b16 %v331
    %v1135 = vunpack.c.h.b16 %v331
    %v1136 = vunpack.c.l.b16 %v332
    %v1137 = vunpack.c.h.b16 %v332
    %v1138 = vunpack.c.l.b16 %v333
    %v1139 = vunpack.c.h.b16 %v333
    %v1140 = vunpack.c.l.b16 %v334
    %v1141 = vunpack.c.h.b16 %v334
    %v1142 = vunpack.c.l.b16 %v335
    %v1143 = vunpack.c.h.b16 %v335
    %v1144 = vunpack.c.l.b16 %v336
    %v1145 = vunpack.c.h.b16 %v336
    %v1146 = vunpack.c.l.b16 %v337
    %v1147 = vunpack.c.h.b16 %v337
    %v1148 = vunpack.c.l.b16 %v338
    %v1149 = vunpack.c.h.b16 %v338
    %v1150 = vunpack.c.l.b16 %v339
    %v1151 = vunpack.c.h.b16 %v339
    %v1152 = vunpack.c.l.b16 %v340
    %v1153 = vunpack.c.h.b16 %v340
    %v1154 = vunpack.c.l.b16 %v341
    %v1155 = vunpack.c.h.b16 %v341
    %v1156 = vunpack.c.l.b16 %v342
    %v1157 = vunpack.c.h.b16 %v342
    %v1158 = vunpack.c.l.b16 %v343
    %v1159 = vunpack.c.h.b16 %v343
    %v1160 = vunpack.c.l.b16 %v344
    %v1161 = vunpack.c.h.b16 %v344
    %v1162 = vunpack.c.l.b16 %v345
    %v1163 = vunpack.c.h.b16 %v345
    %v1164 = vunpack.c.l.b16 %v346
    %v1165 = vunpack.c.h.b16 %v346
    %v1166 = vunpack.c.l.b16 %v347
    %v1167 = vunpack.c.h.b16 %v347
    %v1168 = vunpack.c.l.b16 %v348
    %v1169 = vunpack.c.h.b16 %v348
    %v1170 = vunpack.c.l.b16 %v349
    %v1171 = vunpack.c.h.b16 %v349
    %v1172 = vunpack.c.l.b16 %v350
    %v1173 = vunpack.c.h.b16 %v350
    %v1174 = vunpack.c.l.b16 %v351
    %v1175 = vunpack.c.h.b16 %v351
    %v1176 = vunpack.c.l.b16 %v352
    %v1177 = vunpack.c.h.b16 %v352
    %v1178 = vunpack.c.l.b16 %v353
    %v1179 = vunpack.c.h.b16 %v353
    %v1180 = vunpack.c.l.b16 %v354
    %v1181 = vunpack.c.h.b16 %v354
    %v1182 = vunpack.c.l.b16 %v355
    %v1183 = vunpack.c.h.b16 %v355
    %v1184 = vunpack.c.l.b16 %v356
    %v1185 = vunpack.c.h.b16 %v356
    %v1186 = vunpack.c.l.b16 %v357
    %v1187 = vunpack.c.h.b16 %v357
    %v1188 = vunpack.c.l.b16 %v358
    %v1189 = vunpack.c.h.b16 %v358
    %v1190 = vunpack.c.l.b16 %v359
    %v1191 = vunpack.c.h.b16 %v359
    %v1192 = vunpack.c.l.b16 %v360
    %v1193 = vunpack.c.h.b16 %v360
    %v1194 = vunpack.c.l.b16 %v361
    %v1195 = vunpack.c.h.b16 %v361
    %v1196 = vunpack.c.l.b16 %v362
    %v1197 = vunpack.c.h.b16 %v362
    %v1198 = vunpack.c.l.b16 %v363
    %v1199 = vunpack.c.h.b16 %v363
    %v1200 = vunpack.c.l.b16 %v364
    %v1201 = vunpack.c.h.b16 %v364
    %v1202 = vunpack.c.l.b16 %v365
    %v1203 = vunpack.c.h.b16 %v365
    %v1204 = vunpack.c.l.b16 %v366
    %v1205 = vunpack.c.h.b16 %v366
    %v1206 = vunpack.c.l.b16 %v367
    %v1207 = vunpack.c.h.b16 %v367
    %v1208 = vunpack.c.l.b16 %v368
    %v1209 = vunpack.c.h.b16 %v368
    %v1210 = vunpack.c.l.b16 %v369
    %v1211 = vunpack.c.h.b16 %v369
    %v1212 = vunpack.c.l.b16 %v370
    %v1213 = vunpack.c.h.b16 %v370
    %v1214 = vunpack.c.l.b16 %v371
    %v1215 = vunpack.c.h.b16 %v371
    %v1216 = vunpack.c.l.b16 %v372
    %v1217 = vunpack.c.h.b16 %v372
    %v1218 = vunpack.c.l.b16 %v373
    %v1219 = vunpack.c.h.b16 %v373
    %v1220 = vunpack.c.l.b16 %v374
    %v1221 = vunpack.c.h.b16 %v374
    %v1222 = vunpack.c.l.b16 %v375
    %v1223 = vunpack.c.h.b16 %v375
    %v1224 = vunpack.c.l.b16 %v376
    %v1225 = vunpack.c.h.b16 %v376
    %v1226 = vunpack.c.l.b16 %v377
    %v1227 = vunpack.c.h.b16 %v377
    %v1228 = vunpack.c.l.b16 %v378
    %v1229 = vunpack.c.h.b16 %v378
    %v1230 = vunpack.c.l.b16 %v379
    %v1231 = vunpack.c.h.b16 %v379
    %v1232 = vunpack.c.l.b16 %v380
    %v1233 = vunpack.c.h.b16 %v380
    %v1234 = vunpack.c.l.b16 %v381
    %v1235 = vunpack.c.h.b16 %v381
    %v1236 = vunpack.c.l.b16 %v382
    %v1237 = vunpack.c.h.b16 %v382
    %v1238 = vunpack.c.l.b16 %v383
    %v1239 = vunpack.c.h.b16 %v383
    %v1240 = vunpack.c.l.b16 %v384
    %v1241 = vunpack.c.h.b16 %v384
    %v1242 = vunpack.c.l.b16 %v385
    %v1243 = vunpack.c.h.b16 %v385
    %v1244 = vunpack.c.l.b16 %v386
    %v1245 = vunpack.c.h.b16 %v386
    %v1246 = vunpack.c.l.b16 %v387
    %v1247 = vunpack.c.h.b16 %v387
    %v1248 = vunpack.c.l.b16 %v388
    %v1249 = vunpack.c.h.b16 %v388
    %v1250 = vunpack.c.l.b16 %v389
    %v1251 = vunpack.c.h.b16 %v389
    %v1252 = vunpack.c.l.b16 %v390
    %v1253 = vunpack.c.h.b16 %v390
    %v1254 = vunpack.c.l.b16 %v391
    %v1255 = vunpack.c.h.b16 %v391
    %v1256 = vunpack.c.l.b16 %v392
    %v1257 = vunpack.c.h.b16 %v392
    %v1258 = vunpack.c.l.b16 %v393
    %v1259 = vunpack.c.h.b16 %v393
    %v1260 = vunpack.c.l.b16 %v394
    %v1261 = vunpack.c.h.b16 %v394
    %v1262 = vunpack.c.l.b16 %v395
    %v1263 = vunpack.c.h.b16 %v395
    %v1264 = vunpack.c.l.b16 %v396
    %v1265 = vunpack.c.h.b16 %v396
    %v1266 = vunpack.c.l.b16 %v397
    %v1267 = vunpack.c.h.b16 %v397
    %v1268 = vunpack.c.l.b16 %v398
    %v1269 = vunpack.c.h.b16 %v398
    %v1270 = vunpack.c.l.b16 %v399
    %v1271 = vunpack.c.h.b16 %v399
    %v1272 = vunpack.c.l.b16 %v400
    %v1273 = vunpack.c.h.b16 %v400
    %v1274 = vunpack.c.l.b16 %v401
    %v1275 = vunpack.c.h.b16 %v401
    %v1276 = vunpack.c.l.b16 %v402
    %v1277 = vunpack.c.h.b16 %v402
    %v1278 = vunpack.c.l.b16 %v403
    %v1279 = vunpack.c.h.b16 %v403
    %v1280 = vunpack.c.l.b16 %v404
    %v1281 = vunpack.c.h.b16 %v404
    %v1282 = vunpack.c.l.b16 %v405
    %v1283 = vunpack.c.h.b16 %v405
    %v1284 = vpack.c.b16 %v714, %v708
    %v1285 = vpack.c.b16 %v715, %v709
    %v1286 = vpack.c.b16 %v716, %v710
    %v1287 = vpack.c.b16 %v717, %v711
    %v1288 = vpack.c.b16 %v718, %v712
    %v1289 = vpack.c.b16 %v719, %v713
    %v1290 = vpack.c.b16 %v726, %v720
    %v1291 = vpack.c.b16 %v727, %v721
    %v1292 = vpack.c.b16 %v728, %v722
    %v1293 = vpack.c.b16 %v729, %v723
    %v1294 = vpack.c.b16 %v730, %v724
    %v1295 = vpack.c.b16 %v731, %v725
    %v1296 = vpack.c.b16 %v738, %v732
    %v1297 = vpack.c.b16 %v739, %v733
    %v1298 = vpack.c.b16 %v740, %v734
    %v1299 = vpack.c.b16 %v741, %v735
    %v1300 = vpack.c.b16 %v742, %v736
    %v1301 = vpack.c.b16 %v743, %v737
    %v1302 = vpack.c.b16 %v750, %v744
    %v1303 = vpack.c.b16 %v751, %v745
    %v1304 = vpack.c.b16 %v752, %v746
    %v1305 = vpack.c.b16 %v753, %v747
    %v1306 = vpack.c.b16 %v754, %v748
    %v1307 = vpack.c.b16 %v755, %v749
    %v1308 = vpack.c.b16 %v762, %v756
    %v1309 = vpack.c.b16 %v763, %v757
    %v1310 = vpack.c.b16 %v764, %v758
    %v1311 = vpack.c.b16 %v765, %v759
    %v1312 = vpack.c.b16 %v766, %v760
    %v1313 = vpack.c.b16 %v767, %v761
    %v1314 = vpack.c.b16 %v774, %v768
    %v1315 = vpack.c.b16 %v775, %v769
    %v1316 = vpack.c.b16 %v776, %v770
    %v1317 = vpack.c.b16 %v777, %v771
    %v1318 = vpack.c.b16 %v778, %v772
    %v1319 = vpack.c.b16 %v779, %v773
    %v1320 = vpack.c.b16 %v786, %v780
    %v1321 = vpack.c.b16 %v787, %v781
    %v1322 = vpack.c.b16 %v788, %v782
    %v1323 = vpack.c.b16 %v789, %v783
    %v1324 = vpack.c.b16 %v790, %v784
    %v1325 = vpack.c.b16 %v791, %v785
    %v1326 = vpack.c.b16 %v798, %v792
    %v1327 = vpack.c.b16 %v799, %v793
    %v1328 = vpack.c.b16 %v800, %v794
    %v1329 = vpack.c.b16 %v801, %v795
    %v1330 = vpack.c.b16 %v802, %v796
    %v1331 = vpack.c.b16 %v803, %v797
    %v1332 = vpack.c.b16 %v810, %v804
    %v1333 = vpack.c.b16 %v811, %v805
    %v1334 = vpack.c.b16 %v812, %v806
    %v1335 = vpack.c.b16 %v813, %v807
    %v1336 = vpack.c.b16 %v814, %v808
    %v1337 = vpack.c.b16 %v815, %v809
    %v1338 = vpack.c.b16 %v822, %v816
    %v1339 = vpack.c.b16 %v823, %v817
    %v1340 = vpack.c.b16 %v824, %v818
    %v1341 = vpack.c.b16 %v825, %v819
    %v1342 = vpack.c.b16 %v826, %v820
    %v1343 = vpack.c.b16 %v827, %v821
    %v1344 = vpack.c.b16 %v834, %v828
    %v1345 = vpack.c.b16 %v835, %v829
    %v1346 = vpack.c.b16 %v836, %v830
    %v1347 = vpack.c.b16 %v837, %v831
    %v1348 = vpack.c.b16 %v838, %v832
    %v1349 = vpack.c.b16 %v839, %v833
    %v1350 = vpack.c.b16 %v846, %v840
    %v1351 = vpack.c.b16 %v847, %v841
    %v1352 = vpack.c.b16 %v848, %v842
    %v1353 = vpack.c.b16 %v849, %v843
    %v1354 = vpack.c.b16 %v850, %v844
    %v1355 = vpack.c.b16 %v851, %v845
    %v1356 = vpack.c.b16 %v858, %v852
    %v1357 = vpack.c.b16 %v859, %v853
    %v1358 = vpack.c.b16 %v860, %v854
    %v1359 = vpack.c.b16 %v861, %v855
    %v1360 = vpack.c.b16 %v862, %v856
    %v1361 = vpack.c.b16 %v863, %v857
    %v1362 = vpack.c.b16 %v870, %v864
    %v1363 = vpack.c.b16 %v871, %v865
    %v1364 = vpack.c.b16 %v872, %v866
    %v1365 = vpack.c.b16 %v873, %v867
    %v1366 = vpack.c.b16 %v874, %v868
    %v1367 = vpack.c.b16 %v875, %v869
    %v1368 = vpack.c.b16 %v882, %v876
    %v1369 = vpack.c.b16 %v883, %v877
    %v1370 = vpack.c.b16 %v884, %v878
    %v1371 = vpack.c.b16 %v885, %v879
    %v1372 = vpack.c.b16 %v886, %v880
    %v1373 = vpack.c.b16 %v887, %v881
    %v1374 = vpack.c.b16 %v894, %v888
    %v1375 = vpack.c.b16 %v895, %v889
    %v1376 = vpack.c.b16 %v896, %v890
    %v1377 = vpack.c.b16 %v897, %v891
    %v1378 = vpack.c.b16 %v898, %v892
    %v1379 = vpack.c.b16 %v899, %v893
    %v1380 = vpack.c.b16 %v906, %v900
    %v1381 = vpack.c.b16 %v907, %v901
    %v1382 = vpack.c.b16 %v908, %v902
    %v1383 = vpack.c.b16 %v909, %v903
    %v1384 = vpack.c.b16 %v910, %v904
    %v1385 = vpack.c.b16 %v911, %v905
    %v1386 = vpack.c.b16 %v918, %v912
    %v1387 = vpack.c.b16 %v919, %v913
    %v1388 = vpack.c.b16 %v920, %v914
    %v1389 = vpack.c.b16 %v921, %v915
    %v1390 = vpack.c.b16 %v922, %v916
    %v1391 = vpack.c.b16 %v923, %v917
    %v1392 = vpack.c.b16 %v930, %v924
    %v1393 = vpack.c.b16 %v931, %v925
    %v1394 = vpack.c.b16 %v932, %v926
    %v1395 = vpack.c.b16 %v933, %v927
    %v1396 = vpack.c.b16 %v934, %v928
    %v1397 = vpack.c.b16 %v935, %v929
    %v1398 = vpack.c.b16 %v942, %v936
    %v1399 = vpack.c.b16 %v943, %v937
    %v1400 = vpack.c.b16 %v944, %v938
    %v1401 = vpack.c.b16 %v945, %v939
    %v1402 = vpack.c.b16 %v946, %v940
    %v1403 = vpack.c.b16 %v947, %v941
    %v1404 = vpack.c.b16 %v954, %v948
    %v1405 = vpack.c.b16 %v955, %v949
    %v1406 = vpack.c.b16 %v956, %v950
    %v1407 = vpack.c.b16 %v957, %v951
    %v1408 = vpack.c.b16 %v958, %v952
    %v1409 = vpack.c.b16 %v959, %v953
    %v1410 = vpack.c.b16 %v966, %v960
    %v1411 = vpack.c.b16 %v967, %v961
    %v1412 = vpack.c.b16 %v968, %v962
    %v1413 = vpack.c.b16 %v969, %v963
    %v1414 = vpack.c.b16 %v970, %v964
    %v1415 = vpack.c.b16 %v971, %v965
    %v1416 = vpack.c.b16 %v978, %v972
    %v1417 = vpack.c.b16 %v979, %v973
    %v1418 = vpack.c.b16 %v980, %v974
    %v1419 = vpack.c.b16 %v981, %v975
    %v1420 = vpack.c.b16 %v982, %v976
    %v1421 = vpack.c.b16 %v983, %v977
    %v1422 = vpack.c.b16 %v990, %v984
    %v1423 = vpack.c.b16 %v991, %v985
    %v1424 = vpack.c.b16 %v992, %v986
    %v1425 = vpack.c.b16 %v993, %v987
    %v1426 = vpack.c.b16 %v994, %v988
    %v1427 = vpack.c.b16 %v995, %v989
    %v1428 = vpack.c.b16 %v1002, %v996
    %v1429 = vpack.c.b16 %v1003, %v997
    %v1430 = vpack.c.b16 %v1004, %v998
    %v1431 = vpack.c.b16 %v1005, %v999
    %v1432 = vpack.c.b16 %v1006, %v1000
    %v1433 = vpack.c.b16 %v1007, %v1001
    %v1434 = vpack.c.b16 %v1014, %v1008
    %v1435 = vpack.c.b16 %v1015, %v1009
    %v1436 = vpack.c.b16 %v1016, %v1010
    %v1437 = vpack.c.b16 %v1017, %v1011
    %v1438 = vpack.c.b16 %v1018, %v1012
    %v1439 = vpack.c.b16 %v1019, %v1013
    %v1440 = vpack.c.b16 %v1026, %v1020
    %v1441 = vpack.c.b16 %v1027, %v1021
    %v1442 = vpack.c.b16 %v1028, %v1022
    %v1443 = vpack.c.b16 %v1029, %v1023
    %v1444 = vpack.c.b16 %v1030, %v1024
    %v1445 = vpack.c.b16 %v1031, %v1025
    %v1446 = vpack.c.b16 %v1038, %v1032
    %v1447 = vpack.c.b16 %v1039, %v1033
    %v1448 = vpack.c.b16 %v1040, %v1034
    %v1449 = vpack.c.b16 %v1041, %v1035
    %v1450 = vpack.c.b16 %v1042, %v1036
    %v1451 = vpack.c.b16 %v1043, %v1037
    %v1452 = vpack.c.b16 %v1050, %v1044
    %v1453 = vpack.c.b16 %v1051, %v1045
    %v1454 = vpack.c.b16 %v1052, %v1046
    %v1455 = vpack.c.b16 %v1053, %v1047
    %v1456 = vpack.c.b16 %v1054, %v1048
    %v1457 = vpack.c.b16 %v1055, %v1049
    %v1458 = vpack.c.b16 %v1062, %v1056
    %v1459 = vpack.c.b16 %v1063, %v1057
    %v1460 = vpack.c.b16 %v1064, %v1058
    %v1461 = vpack.c.b16 %v1065, %v1059
    %v1462 = vpack.c.b16 %v1066, %v1060
    %v1463 = vpack.c.b16 %v1067, %v1061
    %v1464 = vpack.c.b16 %v1074, %v1068
    %v1465 = vpack.c.b16 %v1075, %v1069
    %v1466 = vpack.c.b16 %v1076, %v1070
    %v1467 = vpack.c.b16 %v1077, %v1071
    %v1468 = vpack.c.b16 %v1078, %v1072
    %v1469 = vpack.c.b16 %v1079, %v1073
    %v1470 = vpack.c.b16 %v1086, %v1080
    %v1471 = vpack.c.b16 %v1087, %v1081
    %v1472 = vpack.c.b16 %v1088, %v1082
    %v1473 = vpack.c.b16 %v1089, %v1083
    %v1474 = vpack.c.b16 %v1090, %v1084
    %v1475 = vpack.c.b16 %v1091, %v1085
    %v1476 = vpack.c.b16 %v1098, %v1092
    %v1477 = vpack.c.b16 %v1099, %v1093
    %v1478 = vpack.c.b16 %v1100, %v1094
    %v1479 = vpack.c.b16 %v1101, %v1095
    %v1480 = vpack.c.b16 %v1102, %v1096
    %v1481 = vpack.c.b16 %v1103, %v1097
    %v1482 = vpack.c.b16 %v1110, %v1104
    %v1483 = vpack.c.b16 %v1111, %v1105
    %v1484 = vpack.c.b16 %v1112, %v1106
    %v1485 = vpack.c.b16 %v1113, %v1107
    %v1486 = vpack.c.b16 %v1114, %v1108
    %v1487 = vpack.c.b16 %v1115, %v1109
    %v1488 = vpack.c.b16 %v1122, %v1116
    %v1489 = vpack.c.b16 %v1123, %v1117
    %v1490 = vpack.c.b16 %v1124, %v1118
    %v1491 = vpack.c.b16 %v1125, %v1119
    %v1492 = vpack.c.b16 %v1126, %v1120
    %v1493 = vpack.c.b16 %v1127, %v1121
    %v1494 = vpack.c.b16 %v1134, %v1128
    %v1495 = vpack.c.b16 %v1135, %v1129
    %v1496 = vpack.c.b16 %v1136, %v1130
    %v1497 = vpack.c.b16 %v1137, %v1131
    %v1498 = vpack.c.b16 %v1138, %v1132
    %v1499 = vpack.c.b16 %v1139, %v1133
    %v1500 = vpack.c.b16 %v1146, %v1140
    %v1501 = vpack.c.b16 %v1147, %v1141
    %v1502 = vpack.c.b16 %v1148, %v1142
    %v1503 = vpack.c.b16 %v1149, %v1143
    %v1504 = vpack.c.b16 %v1150, %v1144
    %v1505 = vpack.c.b16 %v1151, %v1145
    %v1506 = vpack.c.b16 %v1158, %v1152
    %v1507 = vpack.c.b16 %v1159, %v1153
    %v1508 = vpack.c.b16 %v1160, %v1154
    %v1509 = vpack.c.b16 %v1161, %v1155
    %v1510 = vpack.c.b16 %v1162, %v1156
    %v1511 = vpack.c.b16 %v1163, %v1157
    %v1512 = vpack.c.b16 %v1170, %v1164
    %v1513 = vpack.c.b16 %v1171, %v1165
    %v1514 = vpack.c.b16 %v1172, %v1166
    %v1515 = vpack.c.b16 %v1173, %v1167
    %v1516 = vpack.c.b16 %v1174, %v1168
    %v1517 = vpack.c.b16 %v1175, %v1169
    %v1518 = vpack.c.b16 %v1182, %v1176
    %v1519 = vpack.c.b16 %v1183, %v1177
    %v1520 = vpack.c.b16 %v1184, %v1178
    %v1521 = vpack.c.b16 %v1185, %v1179
    %v1522 = vpack.c.b16 %v1186, %v1180
    %v1523 = vpack.c.b16 %v1187, %v1181
    %v1524 = vpack.c.b16 %v1194, %v1188
    %v1525 = vpack.c.b16 %v1195, %v1189
    %v1526 = vpack.c.b16 %v1196, %v1190
    %v1527 = vpack.c.b16 %v1197, %v1191
    %v1528 = vpack.c.b16 %v1198, %v1192
    %v1529 = vpack.c.b16 %v1199, %v1193
    %v1530 = vpack.c.b16 %v1206, %v1200
    %v1531 = vpack.c.b16 %v1207, %v1201
    %v1532 = vpack.c.b16 %v1208, %v1202
    %v1533 = vpack.c.b16 %v1209, %v1203
    %v1534 = vpack.c.b16 %v1210, %v1204
    %v1535 = vpack.c.b16 %v1211, %v1205
    %v1536 = vpack.c.b16 %v1218, %v1212
    %v1537 = vpack.c.b16 %v1219, %v1213
    %v1538 = vpack.c.b16 %v1220, %v1214
    %v1539 = vpack.c.b16 %v1221, %v1215
    %v1540 = vpack.c.b16 %v1222, %v1216
    %v1541 = vpack.c.b16 %v1223, %v1217
    %v1542 = vpack.c.b16 %v1230, %v1224
    %v1543 = vpack.c.b16 %v1231, %v1225
    %v1544 = vpack.c.b16 %v1232, %v1226
    %v1545 = vpack.c.b16 %v1233, %v1227
    %v1546 = vpack.c.b16 %v1234, %v1228
    %v1547 = vpack.c.b16 %v1235, %v1229
    %v1548 = vpack.c.b16 %v1242, %v1236
    %v1549 = vpack.c.b16 %v1243, %v1237
    %v1550 = vpack.c.b16 %v1244, %v1238
    %v1551 = vpack.c.b16 %v1245, %v1239
    %v1552 = vpack.c.b16 %v1246, %v1240
    %v1553 = vpack.c.b16 %v1247, %v1241
    %v1554 = vpack.c.b16 %v1254, %v1248
    %v1555 = vpack.c.b16 %v1255, %v1249
    %v1556 = vpack.c.b16 %v1256, %v1250
    %v1557 = vpack.c.b16 %v1257, %v1251
    %v1558 = vpack.c.b16 %v1258, %v1252
    %v1559 = vpack.c.b16 %v1259, %v1253
    %v1560 = vpack.c.b16 %v1266, %v1260
    %v1561 = vpack.c.b16 %v1267, %v1261
    %v1562 = vpack.c.b16 %v1268, %v1262
    %v1563 = vpack.c.b16 %v1269, %v1263
    %v1564 = vpack.c.b16 %v1270, %v1264
    %v1565 = vpack.c.b16 %v1271, %v1265
    %v1566 = vpack.c.b16 %v1278, %v1272
    %v1567 = vpack.c.b16 %v1279, %v1273
    %v1568 = vpack.c.b16 %v1280, %v1274
    %v1569 = vpack.c.b16 %v1281, %v1275
    %v1570 = vpack.c.b16 %v1282, %v1276
    %v1571 = vpack.c.b16 %v1283, %v1277
    %1860 = vmatpush.bf16.msra.mxu0 %v1326
    %1861 = vmatpush.bf16.msra.mxu0 %v1320
    %1862 = vmatpush.bf16.msra.mxu0 %v1314
    %1863 = vmatpush.bf16.msra.mxu0 %v1308
    %1864 = vmatpush.bf16.msra.mxu0 %v1302
    %1865 = vmatpush.bf16.msra.mxu0 %v1296
    %1866 = vmatpush.bf16.msra.mxu0 %v1290
    %1867 = vmatpush.bf16.msra.mxu0 %v1284
    %1868 = vmatmul.bf16.gmra.mxu0 %v112
    %v1869 = vpop.f32.mrf.mxu0
    %v1870 = vadd.f32 %v408, %v1869
    %v1871 = vpop.f32.mrf.mxu0
    %1872 = vdwg.mxu0
    %1873 = vmatpush.bf16.msra.mxu0 %v1374
    %1874 = vmatpush.bf16.msra.mxu0 %v1368
    %1875 = vmatpush.bf16.msra.mxu0 %v1362
    %1876 = vmatpush.bf16.msra.mxu0 %v1356
    %1877 = vmatpush.bf16.msra.mxu0 %v1350
    %1878 = vmatpush.bf16.msra.mxu0 %v1344
    %1879 = vmatpush.bf16.msra.mxu0 %v1338
    %1880 = vmatpush.bf16.msra.mxu0 %v1332
    %1881 = vmatmul.bf16.gmra.mxu0 %v113
    %v1882 = vpop.f32.mrf.mxu0
    %v1883 = vadd.f32 %v1870, %v1882
    %v1884 = vpop.f32.mrf.mxu0
    %1885 = vdwg.mxu0
    %1886 = vmatpush.bf16.msra.mxu0 %v1422
    %1887 = vmatpush.bf16.msra.mxu0 %v1416
    %1888 = vmatpush.bf16.msra.mxu0 %v1410
    %1889 = vmatpush.bf16.msra.mxu0 %v1404
    %1890 = vmatpush.bf16.msra.mxu0 %v1398
    %1891 = vmatpush.bf16.msra.mxu0 %v1392
    %1892 = vmatpush.bf16.msra.mxu0 %v1386
    %1893 = vmatpush.bf16.msra.mxu0 %v1380
    %1894 = vmatmul.bf16.gmra.mxu0 %v114
    %v1895 = vpop.f32.mrf.mxu0
    %v1896 = vadd.f32 %v1883, %v1895
    %v1897 = vpop.f32.mrf.mxu0
    %1898 = vdwg.mxu0
    %1899 = vmatpush.bf16.msra.mxu0 %v1470
    %1900 = vmatpush.bf16.msra.mxu0 %v1464
    %1901 = vmatpush.bf16.msra.mxu0 %v1458
    %1902 = vmatpush.bf16.msra.mxu0 %v1452
    %1903 = vmatpush.bf16.msra.mxu0 %v1446
    %1904 = vmatpush.bf16.msra.mxu0 %v1440
    %1905 = vmatpush.bf16.msra.mxu0 %v1434
    %1906 = vmatpush.bf16.msra.mxu0 %v1428
    %1907 = vmatmul.bf16.gmra.mxu0 %v115
    %v1908 = vpop.f32.mrf.mxu0
    %v1909 = vadd.f32 %v1896, %v1908
    %v1910 = vpop.f32.mrf.mxu0
    %1911 = vdwg.mxu0
    %1912 = vmatpush.bf16.msra.mxu0 %v1518
    %1913 = vmatpush.bf16.msra.mxu0 %v1512
    %1914 = vmatpush.bf16.msra.mxu0 %v1506
    %1915 = vmatpush.bf16.msra.mxu0 %v1500
    %1916 = vmatpush.bf16.msra.mxu0 %v1494
    %1917 = vmatpush.bf16.msra.mxu0 %v1488
    %1918 = vmatpush.bf16.msra.mxu0 %v1482
    %1919 = vmatpush.bf16.msra.mxu0 %v1476
    %1920 = vmatmul.bf16.gmra.mxu0 %v116
    %v1921 = vpop.f32.mrf.mxu0
    %v1922 = vadd.f32 %v1909, %v1921
    %v1923 = vpop.f32.mrf.mxu0
    %1924 = vdwg.mxu0
    %1925 = vmatpush.bf16.msra.mxu0 %v1566
    %1926 = vmatpush.bf16.msra.mxu0 %v1560
    %1927 = vmatpush.bf16.msra.mxu0 %v1554
    %1928 = vmatpush.bf16.msra.mxu0 %v1548
    %1929 = vmatpush.bf16.msra.mxu0 %v1542
    %1930 = vmatpush.bf16.msra.mxu0 %v1536
    %1931 = vmatpush.bf16.msra.mxu0 %v1530
    %1932 = vmatpush.bf16.msra.mxu0 %v1524
    %1933 = vmatmul.bf16.gmra.mxu0 %v117
    %v1934 = vpop.f32.mrf.mxu0
    %v1935 = vadd.f32 %v1922, %v1934
    %v1936 = vpop.f32.mrf.mxu0
    %1937 = vdwg.mxu0
    %1938 = vmatpush.bf16.msra.mxu0 %v1327
    %1939 = vmatpush.bf16.msra.mxu0 %v1321
    %1940 = vmatpush.bf16.msra.mxu0 %v1315
    %1941 = vmatpush.bf16.msra.mxu0 %v1309
    %1942 = vmatpush.bf16.msra.mxu0 %v1303
    %1943 = vmatpush.bf16.msra.mxu0 %v1297
    %1944 = vmatpush.bf16.msra.mxu0 %v1291
    %1945 = vmatpush.bf16.msra.mxu0 %v1285
    %1946 = vmatmul.bf16.gmra.mxu0 %v112
    %v1947 = vpop.f32.mrf.mxu0
    %v1948 = vadd.f32 %v409, %v1947
    %v1949 = vpop.f32.mrf.mxu0
    %1950 = vdwg.mxu0
    %1951 = vmatpush.bf16.msra.mxu0 %v1375
    %1952 = vmatpush.bf16.msra.mxu0 %v1369
    %1953 = vmatpush.bf16.msra.mxu0 %v1363
    %1954 = vmatpush.bf16.msra.mxu0 %v1357
    %1955 = vmatpush.bf16.msra.mxu0 %v1351
    %1956 = vmatpush.bf16.msra.mxu0 %v1345
    %1957 = vmatpush.bf16.msra.mxu0 %v1339
    %1958 = vmatpush.bf16.msra.mxu0 %v1333
    %1959 = vmatmul.bf16.gmra.mxu0 %v113
    %v1960 = vpop.f32.mrf.mxu0
    %v1961 = vadd.f32 %v1948, %v1960
    %v1962 = vpop.f32.mrf.mxu0
    %1963 = vdwg.mxu0
    %1964 = vmatpush.bf16.msra.mxu0 %v1423
    %1965 = vmatpush.bf16.msra.mxu0 %v1417
    %1966 = vmatpush.bf16.msra.mxu0 %v1411
    %1967 = vmatpush.bf16.msra.mxu0 %v1405
    %1968 = vmatpush.bf16.msra.mxu0 %v1399
    %1969 = vmatpush.bf16.msra.mxu0 %v1393
    %1970 = vmatpush.bf16.msra.mxu0 %v1387
    %1971 = vmatpush.bf16.msra.mxu0 %v1381
    %1972 = vmatmul.bf16.gmra.mxu0 %v114
    %v1973 = vpop.f32.mrf.mxu0
    %v1974 = vadd.f32 %v1961, %v1973
    %v1975 = vpop.f32.mrf.mxu0
    %1976 = vdwg.mxu0
    %1977 = vmatpush.bf16.msra.mxu0 %v1471
    %1978 = vmatpush.bf16.msra.mxu0 %v1465
    %1979 = vmatpush.bf16.msra.mxu0 %v1459
    %1980 = vmatpush.bf16.msra.mxu0 %v1453
    %1981 = vmatpush.bf16.msra.mxu0 %v1447
    %1982 = vmatpush.bf16.msra.mxu0 %v1441
    %1983 = vmatpush.bf16.msra.mxu0 %v1435
    %1984 = vmatpush.bf16.msra.mxu0 %v1429
    %1985 = vmatmul.bf16.gmra.mxu0 %v115
    %v1986 = vpop.f32.mrf.mxu0
    %v1987 = vadd.f32 %v1974, %v1986
    %v1988 = vpop.f32.mrf.mxu0
    %1989 = vdwg.mxu0
    %1990 = vmatpush.bf16.msra.mxu0 %v1519
    %1991 = vmatpush.bf16.msra.mxu0 %v1513
    %1992 = vmatpush.bf16.msra.mxu0 %v1507
    %1993 = vmatpush.bf16.msra.mxu0 %v1501
    %1994 = vmatpush.bf16.msra.mxu0 %v1495
    %1995 = vmatpush.bf16.msra.mxu0 %v1489
    %1996 = vmatpush.bf16.msra.mxu0 %v1483
    %1997 = vmatpush.bf16.msra.mxu0 %v1477
    %1998 = vmatmul.bf16.gmra.mxu0 %v116
    %v1999 = vpop.f32.mrf.mxu0
    %v2000 = vadd.f32 %v1987, %v1999
    %v2001 = vpop.f32.mrf.mxu0
    %2002 = vdwg.mxu0
    %2003 = vmatpush.bf16.msra.mxu0 %v1567
    %2004 = vmatpush.bf16.msra.mxu0 %v1561
    %2005 = vmatpush.bf16.msra.mxu0 %v1555
    %2006 = vmatpush.bf16.msra.mxu0 %v1549
    %2007 = vmatpush.bf16.msra.mxu0 %v1543
    %2008 = vmatpush.bf16.msra.mxu0 %v1537
    %2009 = vmatpush.bf16.msra.mxu0 %v1531
    %2010 = vmatpush.bf16.msra.mxu0 %v1525
    %2011 = vmatmul.bf16.gmra.mxu0 %v117
    %v2012 = vpop.f32.mrf.mxu0
    %v2013 = vadd.f32 %v2000, %v2012
    %v2014 = vpop.f32.mrf.mxu0
    %2015 = vdwg.mxu0
    %2016 = vmatpush.bf16.msra.mxu0 %v1328
    %2017 = vmatpush.bf16.msra.mxu0 %v1322
    %2018 = vmatpush.bf16.msra.mxu0 %v1316
    %2019 = vmatpush.bf16.msra.mxu0 %v1310
    %2020 = vmatpush.bf16.msra.mxu0 %v1304
    %2021 = vmatpush.bf16.msra.mxu0 %v1298
    %2022 = vmatpush.bf16.msra.mxu0 %v1292
    %2023 = vmatpush.bf16.msra.mxu0 %v1286
    %2024 = vmatmul.bf16.gmra.mxu0 %v112
    %v2025 = vpop.f32.mrf.mxu0
    %v2026 = vadd.f32 %v410, %v2025
    %v2027 = vpop.f32.mrf.mxu0
    %2028 = vdwg.mxu0
    %2029 = vmatpush.bf16.msra.mxu0 %v1376
    %2030 = vmatpush.bf16.msra.mxu0 %v1370
    %2031 = vmatpush.bf16.msra.mxu0 %v1364
    %2032 = vmatpush.bf16.msra.mxu0 %v1358
    %2033 = vmatpush.bf16.msra.mxu0 %v1352
    %2034 = vmatpush.bf16.msra.mxu0 %v1346
    %2035 = vmatpush.bf16.msra.mxu0 %v1340
    %2036 = vmatpush.bf16.msra.mxu0 %v1334
    %2037 = vmatmul.bf16.gmra.mxu0 %v113
    %v2038 = vpop.f32.mrf.mxu0
    %v2039 = vadd.f32 %v2026, %v2038
    %v2040 = vpop.f32.mrf.mxu0
    %2041 = vdwg.mxu0
    %2042 = vmatpush.bf16.msra.mxu0 %v1424
    %2043 = vmatpush.bf16.msra.mxu0 %v1418
    %2044 = vmatpush.bf16.msra.mxu0 %v1412
    %2045 = vmatpush.bf16.msra.mxu0 %v1406
    %2046 = vmatpush.bf16.msra.mxu0 %v1400
    %2047 = vmatpush.bf16.msra.mxu0 %v1394
    %2048 = vmatpush.bf16.msra.mxu0 %v1388
    %2049 = vmatpush.bf16.msra.mxu0 %v1382
    %2050 = vmatmul.bf16.gmra.mxu0 %v114
    %v2051 = vpop.f32.mrf.mxu0
    %v2052 = vadd.f32 %v2039, %v2051
    %v2053 = vpop.f32.mrf.mxu0
    %2054 = vdwg.mxu0
    %2055 = vmatpush.bf16.msra.mxu0 %v1472
    %2056 = vmatpush.bf16.msra.mxu0 %v1466
    %2057 = vmatpush.bf16.msra.mxu0 %v1460
    %2058 = vmatpush.bf16.msra.mxu0 %v1454
    %2059 = vmatpush.bf16.msra.mxu0 %v1448
    %2060 = vmatpush.bf16.msra.mxu0 %v1442
    %2061 = vmatpush.bf16.msra.mxu0 %v1436
    %2062 = vmatpush.bf16.msra.mxu0 %v1430
    %2063 = vmatmul.bf16.gmra.mxu0 %v115
    %v2064 = vpop.f32.mrf.mxu0
    %v2065 = vadd.f32 %v2052, %v2064
    %v2066 = vpop.f32.mrf.mxu0
    %2067 = vdwg.mxu0
    %2068 = vmatpush.bf16.msra.mxu0 %v1520
    %2069 = vmatpush.bf16.msra.mxu0 %v1514
    %2070 = vmatpush.bf16.msra.mxu0 %v1508
    %2071 = vmatpush.bf16.msra.mxu0 %v1502
    %2072 = vmatpush.bf16.msra.mxu0 %v1496
    %2073 = vmatpush.bf16.msra.mxu0 %v1490
    %2074 = vmatpush.bf16.msra.mxu0 %v1484
    %2075 = vmatpush.bf16.msra.mxu0 %v1478
    %2076 = vmatmul.bf16.gmra.mxu0 %v116
    %v2077 = vpop.f32.mrf.mxu0
    %v2078 = vadd.f32 %v2065, %v2077
    %v2079 = vpop.f32.mrf.mxu0
    %2080 = vdwg.mxu0
    %2081 = vmatpush.bf16.msra.mxu0 %v1568
    %2082 = vmatpush.bf16.msra.mxu0 %v1562
    %2083 = vmatpush.bf16.msra.mxu0 %v1556
    %2084 = vmatpush.bf16.msra.mxu0 %v1550
    %2085 = vmatpush.bf16.msra.mxu0 %v1544
    %2086 = vmatpush.bf16.msra.mxu0 %v1538
    %2087 = vmatpush.bf16.msra.mxu0 %v1532
    %2088 = vmatpush.bf16.msra.mxu0 %v1526
    %2089 = vmatmul.bf16.gmra.mxu0 %v117
    %v2090 = vpop.f32.mrf.mxu0
    %v2091 = vadd.f32 %v2078, %v2090
    %v2092 = vpop.f32.mrf.mxu0
    %2093 = vdwg.mxu0
    %2094 = vmatpush.bf16.msra.mxu0 %v1329
    %2095 = vmatpush.bf16.msra.mxu0 %v1323
    %2096 = vmatpush.bf16.msra.mxu0 %v1317
    %2097 = vmatpush.bf16.msra.mxu0 %v1311
    %2098 = vmatpush.bf16.msra.mxu0 %v1305
    %2099 = vmatpush.bf16.msra.mxu0 %v1299
    %2100 = vmatpush.bf16.msra.mxu0 %v1293
    %2101 = vmatpush.bf16.msra.mxu0 %v1287
    %2102 = vmatmul.bf16.gmra.mxu0 %v112
    %v2103 = vpop.f32.mrf.mxu0
    %v2104 = vadd.f32 %v411, %v2103
    %v2105 = vpop.f32.mrf.mxu0
    %2106 = vdwg.mxu0
    %2107 = vmatpush.bf16.msra.mxu0 %v1377
    %2108 = vmatpush.bf16.msra.mxu0 %v1371
    %2109 = vmatpush.bf16.msra.mxu0 %v1365
    %2110 = vmatpush.bf16.msra.mxu0 %v1359
    %2111 = vmatpush.bf16.msra.mxu0 %v1353
    %2112 = vmatpush.bf16.msra.mxu0 %v1347
    %2113 = vmatpush.bf16.msra.mxu0 %v1341
    %2114 = vmatpush.bf16.msra.mxu0 %v1335
    %2115 = vmatmul.bf16.gmra.mxu0 %v113
    %v2116 = vpop.f32.mrf.mxu0
    %v2117 = vadd.f32 %v2104, %v2116
    %v2118 = vpop.f32.mrf.mxu0
    %2119 = vdwg.mxu0
    %2120 = vmatpush.bf16.msra.mxu0 %v1425
    %2121 = vmatpush.bf16.msra.mxu0 %v1419
    %2122 = vmatpush.bf16.msra.mxu0 %v1413
    %2123 = vmatpush.bf16.msra.mxu0 %v1407
    %2124 = vmatpush.bf16.msra.mxu0 %v1401
    %2125 = vmatpush.bf16.msra.mxu0 %v1395
    %2126 = vmatpush.bf16.msra.mxu0 %v1389
    %2127 = vmatpush.bf16.msra.mxu0 %v1383
    %2128 = vmatmul.bf16.gmra.mxu0 %v114
    %v2129 = vpop.f32.mrf.mxu0
    %v2130 = vadd.f32 %v2117, %v2129
    %v2131 = vpop.f32.mrf.mxu0
    %2132 = vdwg.mxu0
    %2133 = vmatpush.bf16.msra.mxu0 %v1473
    %2134 = vmatpush.bf16.msra.mxu0 %v1467
    %2135 = vmatpush.bf16.msra.mxu0 %v1461
    %2136 = vmatpush.bf16.msra.mxu0 %v1455
    %2137 = vmatpush.bf16.msra.mxu0 %v1449
    %2138 = vmatpush.bf16.msra.mxu0 %v1443
    %2139 = vmatpush.bf16.msra.mxu0 %v1437
    %2140 = vmatpush.bf16.msra.mxu0 %v1431
    %2141 = vmatmul.bf16.gmra.mxu0 %v115
    %v2142 = vpop.f32.mrf.mxu0
    %v2143 = vadd.f32 %v2130, %v2142
    %v2144 = vpop.f32.mrf.mxu0
    %2145 = vdwg.mxu0
    %2146 = vmatpush.bf16.msra.mxu0 %v1521
    %2147 = vmatpush.bf16.msra.mxu0 %v1515
    %2148 = vmatpush.bf16.msra.mxu0 %v1509
    %2149 = vmatpush.bf16.msra.mxu0 %v1503
    %2150 = vmatpush.bf16.msra.mxu0 %v1497
    %2151 = vmatpush.bf16.msra.mxu0 %v1491
    %2152 = vmatpush.bf16.msra.mxu0 %v1485
    %2153 = vmatpush.bf16.msra.mxu0 %v1479
    %2154 = vmatmul.bf16.gmra.mxu0 %v116
    %v2155 = vpop.f32.mrf.mxu0
    %v2156 = vadd.f32 %v2143, %v2155
    %v2157 = vpop.f32.mrf.mxu0
    %2158 = vdwg.mxu0
    %2159 = vmatpush.bf16.msra.mxu0 %v1569
    %2160 = vmatpush.bf16.msra.mxu0 %v1563
    %2161 = vmatpush.bf16.msra.mxu0 %v1557
    %2162 = vmatpush.bf16.msra.mxu0 %v1551
    %2163 = vmatpush.bf16.msra.mxu0 %v1545
    %2164 = vmatpush.bf16.msra.mxu0 %v1539
    %2165 = vmatpush.bf16.msra.mxu0 %v1533
    %2166 = vmatpush.bf16.msra.mxu0 %v1527
    %2167 = vmatmul.bf16.gmra.mxu0 %v117
    %v2168 = vpop.f32.mrf.mxu0
    %v2169 = vadd.f32 %v2156, %v2168
    %v2170 = vpop.f32.mrf.mxu0
    %2171 = vdwg.mxu0
    %2172 = vmatpush.bf16.msra.mxu0 %v1330
    %2173 = vmatpush.bf16.msra.mxu0 %v1324
    %2174 = vmatpush.bf16.msra.mxu0 %v1318
    %2175 = vmatpush.bf16.msra.mxu0 %v1312
    %2176 = vmatpush.bf16.msra.mxu0 %v1306
    %2177 = vmatpush.bf16.msra.mxu0 %v1300
    %2178 = vmatpush.bf16.msra.mxu0 %v1294
    %2179 = vmatpush.bf16.msra.mxu0 %v1288
    %2180 = vmatmul.bf16.gmra.mxu0 %v112
    %v2181 = vpop.f32.mrf.mxu0
    %v2182 = vadd.f32 %v412, %v2181
    %v2183 = vpop.f32.mrf.mxu0
    %2184 = vdwg.mxu0
    %2185 = vmatpush.bf16.msra.mxu0 %v1378
    %2186 = vmatpush.bf16.msra.mxu0 %v1372
    %2187 = vmatpush.bf16.msra.mxu0 %v1366
    %2188 = vmatpush.bf16.msra.mxu0 %v1360
    %2189 = vmatpush.bf16.msra.mxu0 %v1354
    %2190 = vmatpush.bf16.msra.mxu0 %v1348
    %2191 = vmatpush.bf16.msra.mxu0 %v1342
    %2192 = vmatpush.bf16.msra.mxu0 %v1336
    %2193 = vmatmul.bf16.gmra.mxu0 %v113
    %v2194 = vpop.f32.mrf.mxu0
    %v2195 = vadd.f32 %v2182, %v2194
    %v2196 = vpop.f32.mrf.mxu0
    %2197 = vdwg.mxu0
    %2198 = vmatpush.bf16.msra.mxu0 %v1426
    %2199 = vmatpush.bf16.msra.mxu0 %v1420
    %2200 = vmatpush.bf16.msra.mxu0 %v1414
    %2201 = vmatpush.bf16.msra.mxu0 %v1408
    %2202 = vmatpush.bf16.msra.mxu0 %v1402
    %2203 = vmatpush.bf16.msra.mxu0 %v1396
    %2204 = vmatpush.bf16.msra.mxu0 %v1390
    %2205 = vmatpush.bf16.msra.mxu0 %v1384
    %2206 = vmatmul.bf16.gmra.mxu0 %v114
    %v2207 = vpop.f32.mrf.mxu0
    %v2208 = vadd.f32 %v2195, %v2207
    %v2209 = vpop.f32.mrf.mxu0
    %2210 = vdwg.mxu0
    %2211 = vmatpush.bf16.msra.mxu0 %v1474
    %2212 = vmatpush.bf16.msra.mxu0 %v1468
    %2213 = vmatpush.bf16.msra.mxu0 %v1462
    %2214 = vmatpush.bf16.msra.mxu0 %v1456
    %2215 = vmatpush.bf16.msra.mxu0 %v1450
    %2216 = vmatpush.bf16.msra.mxu0 %v1444
    %2217 = vmatpush.bf16.msra.mxu0 %v1438
    %2218 = vmatpush.bf16.msra.mxu0 %v1432
    %2219 = vmatmul.bf16.gmra.mxu0 %v115
    %v2220 = vpop.f32.mrf.mxu0
    %v2221 = vadd.f32 %v2208, %v2220
    %v2222 = vpop.f32.mrf.mxu0
    %2223 = vdwg.mxu0
    %2224 = vmatpush.bf16.msra.mxu0 %v1522
    %2225 = vmatpush.bf16.msra.mxu0 %v1516
    %2226 = vmatpush.bf16.msra.mxu0 %v1510
    %2227 = vmatpush.bf16.msra.mxu0 %v1504
    %2228 = vmatpush.bf16.msra.mxu0 %v1498
    %2229 = vmatpush.bf16.msra.mxu0 %v1492
    %2230 = vmatpush.bf16.msra.mxu0 %v1486
    %2231 = vmatpush.bf16.msra.mxu0 %v1480
    %2232 = vmatmul.bf16.gmra.mxu0 %v116
    %v2233 = vpop.f32.mrf.mxu0
    %v2234 = vadd.f32 %v2221, %v2233
    %v2235 = vpop.f32.mrf.mxu0
    %2236 = vdwg.mxu0
    %2237 = vmatpush.bf16.msra.mxu0 %v1570
    %2238 = vmatpush.bf16.msra.mxu0 %v1564
    %2239 = vmatpush.bf16.msra.mxu0 %v1558
    %2240 = vmatpush.bf16.msra.mxu0 %v1552
    %2241 = vmatpush.bf16.msra.mxu0 %v1546
    %2242 = vmatpush.bf16.msra.mxu0 %v1540
    %2243 = vmatpush.bf16.msra.mxu0 %v1534
    %2244 = vmatpush.bf16.msra.mxu0 %v1528
    %2245 = vmatmul.bf16.gmra.mxu0 %v117
    %v2246 = vpop.f32.mrf.mxu0
    %v2247 = vadd.f32 %v2234, %v2246
    %v2248 = vpop.f32.mrf.mxu0
    %2249 = vdwg.mxu0
    %2250 = vmatpush.bf16.msra.mxu0 %v1331
    %2251 = vmatpush.bf16.msra.mxu0 %v1325
    %2252 = vmatpush.bf16.msra.mxu0 %v1319
    %2253 = vmatpush.bf16.msra.mxu0 %v1313
    %2254 = vmatpush.bf16.msra.mxu0 %v1307
    %2255 = vmatpush.bf16.msra.mxu0 %v1301
    %2256 = vmatpush.bf16.msra.mxu0 %v1295
    %2257 = vmatpush.bf16.msra.mxu0 %v1289
    %2258 = vmatmul.bf16.gmra.mxu0 %v112
    %v2259 = vpop.f32.mrf.mxu0
    %v2260 = vadd.f32 %v413, %v2259
    %v2261 = vpop.f32.mrf.mxu0
    %2262 = vdwg.mxu0
    %2263 = vmatpush.bf16.msra.mxu0 %v1379
    %2264 = vmatpush.bf16.msra.mxu0 %v1373
    %2265 = vmatpush.bf16.msra.mxu0 %v1367
    %2266 = vmatpush.bf16.msra.mxu0 %v1361
    %2267 = vmatpush.bf16.msra.mxu0 %v1355
    %2268 = vmatpush.bf16.msra.mxu0 %v1349
    %2269 = vmatpush.bf16.msra.mxu0 %v1343
    %2270 = vmatpush.bf16.msra.mxu0 %v1337
    %2271 = vmatmul.bf16.gmra.mxu0 %v113
    %v2272 = vpop.f32.mrf.mxu0
    %v2273 = vadd.f32 %v2260, %v2272
    %v2274 = vpop.f32.mrf.mxu0
    %2275 = vdwg.mxu0
    %2276 = vmatpush.bf16.msra.mxu0 %v1427
    %2277 = vmatpush.bf16.msra.mxu0 %v1421
    %2278 = vmatpush.bf16.msra.mxu0 %v1415
    %2279 = vmatpush.bf16.msra.mxu0 %v1409
    %2280 = vmatpush.bf16.msra.mxu0 %v1403
    %2281 = vmatpush.bf16.msra.mxu0 %v1397
    %2282 = vmatpush.bf16.msra.mxu0 %v1391
    %2283 = vmatpush.bf16.msra.mxu0 %v1385
    %2284 = vmatmul.bf16.gmra.mxu0 %v114
    %v2285 = vpop.f32.mrf.mxu0
    %v2286 = vadd.f32 %v2273, %v2285
    %v2287 = vpop.f32.mrf.mxu0
    %2288 = vdwg.mxu0
    %2289 = vmatpush.bf16.msra.mxu0 %v1475
    %2290 = vmatpush.bf16.msra.mxu0 %v1469
    %2291 = vmatpush.bf16.msra.mxu0 %v1463
    %2292 = vmatpush.bf16.msra.mxu0 %v1457
    %2293 = vmatpush.bf16.msra.mxu0 %v1451
    %2294 = vmatpush.bf16.msra.mxu0 %v1445
    %2295 = vmatpush.bf16.msra.mxu0 %v1439
    %2296 = vmatpush.bf16.msra.mxu0 %v1433
    %2297 = vmatmul.bf16.gmra.mxu0 %v115
    %v2298 = vpop.f32.mrf.mxu0
    %v2299 = vadd.f32 %v2286, %v2298
    %v2300 = vpop.f32.mrf.mxu0
    %2301 = vdwg.mxu0
    %2302 = vmatpush.bf16.msra.mxu0 %v1523
    %2303 = vmatpush.bf16.msra.mxu0 %v1517
    %2304 = vmatpush.bf16.msra.mxu0 %v1511
    %2305 = vmatpush.bf16.msra.mxu0 %v1505
    %2306 = vmatpush.bf16.msra.mxu0 %v1499
    %2307 = vmatpush.bf16.msra.mxu0 %v1493
    %2308 = vmatpush.bf16.msra.mxu0 %v1487
    %2309 = vmatpush.bf16.msra.mxu0 %v1481
    %2310 = vmatmul.bf16.gmra.mxu0 %v116
    %v2311 = vpop.f32.mrf.mxu0
    %v2312 = vadd.f32 %v2299, %v2311
    %v2313 = vpop.f32.mrf.mxu0
    %2314 = vdwg.mxu0
    %2315 = vmatpush.bf16.msra.mxu0 %v1571
    %2316 = vmatpush.bf16.msra.mxu0 %v1565
    %2317 = vmatpush.bf16.msra.mxu0 %v1559
    %2318 = vmatpush.bf16.msra.mxu0 %v1553
    %2319 = vmatpush.bf16.msra.mxu0 %v1547
    %2320 = vmatpush.bf16.msra.mxu0 %v1541
    %2321 = vmatpush.bf16.msra.mxu0 %v1535
    %2322 = vmatpush.bf16.msra.mxu0 %v1529
    %2323 = vmatmul.bf16.gmra.mxu0 %v117
    %v2324 = vpop.f32.mrf.mxu0
    %v2325 = vadd.f32 %v2312, %v2324
    %v2326 = vpop.f32.mrf.mxu0
    %2327 = vdwg.mxu0
    %v2328 = vtanh.pop %v1935
    %v2329 = vtanh.pop %v2013
    %v2330 = vtanh.pop %v2091
    %v2331 = vtanh.pop %v2169
    %v2332 = vtanh.pop %v2247
    %v2333 = vtanh.pop %v2325
    %v2334 = vpack.c.bf16 %v2328, %v2328
    %v2335 = vpack.c.bf16 %v2329, %v2329
    %v2336 = vpack.c.bf16 %v2330, %v2330
    %v2337 = vpack.c.bf16 %v2331, %v2331
    %v2338 = vpack.c.bf16 %v2332, %v2332
    %v2339 = vpack.c.bf16 %v2333, %v2333
    %v2340 = vld [vmem:[#allocation8] sm:$0xf]
    %v2341 = vld [vmem:[#allocation8 + $0x4] sm:$0xf]
    %v2342 = vld [vmem:[#allocation8 + $0x8] sm:$0xf]
    %v2343 = vld [vmem:[#allocation8 + $0xc] sm:$0xf]
    %v2344 = vld [vmem:[#allocation8 + $0x10] sm:$0xf]
    %v2345 = vld [vmem:[#allocation8 + $0x14] sm:$0xf]
    %v2346 = vld [vmem:[#allocation8 + $0x18] sm:$0xf]
    %v2347 = vld [vmem:[#allocation8 + $0x1c] sm:$0xf]
    %v2348 = vld [vmem:[#allocation8 + $0x20] sm:$0xf]
    %v2349 = vld [vmem:[#allocation8 + $0x24] sm:$0xf]
    %v2350 = vld [vmem:[#allocation8 + $0x28] sm:$0xf]
    %v2351 = vld [vmem:[#allocation8 + $0x2c] sm:$0xf]
    %v2352 = vld [vmem:[#allocation8 + $0x30] sm:$0xf]
    %v2353 = vld [vmem:[#allocation8 + $0x34] sm:$0xf]
    %v2354 = vld [vmem:[#allocation8 + $0x38] sm:$0xf]
    %v2355 = vld [vmem:[#allocation8 + $0x3c] sm:$0xf]
    %v2356 = vld [vmem:[#allocation8 + $0x40] sm:$0xf]
    %v2357 = vld [vmem:[#allocation8 + $0x44] sm:$0xf]
    %v2358 = vld [vmem:[#allocation8 + $0x48] sm:$0xf]
    %v2359 = vld [vmem:[#allocation8 + $0x4c] sm:$0xf]
    %v2360 = vld [vmem:[#allocation8 + $0x50] sm:$0xf]
    %v2361 = vld [vmem:[#allocation8 + $0x54] sm:$0xf]
    %v2362 = vld [vmem:[#allocation8 + $0x58] sm:$0xf]
    %v2363 = vld [vmem:[#allocation8 + $0x5c] sm:$0xf]
    %v2364 = vld [vmem:[#allocation8 + $0x60] sm:$0xf]
    %v2365 = vld [vmem:[#allocation8 + $0x64] sm:$0xf]
    %v2366 = vld [vmem:[#allocation8 + $0x68] sm:$0xf]
    %v2367 = vld [vmem:[#allocation8 + $0x6c] sm:$0xf]
    %v2368 = vld [vmem:[#allocation8 + $0x70] sm:$0xf]
    %v2369 = vld [vmem:[#allocation8 + $0x74] sm:$0xf]
    %v2370 = vld [vmem:[#allocation8 + $0x78] sm:$0xf]
    %v2371 = vld [vmem:[#allocation8 + $0x7c] sm:$0xf]
    %v2372 = vld [vmem:[#allocation8 + $0x80] sm:$0xf]
    %v2373 = vld [vmem:[#allocation8 + $0x84] sm:$0xf]
    %v2374 = vld [vmem:[#allocation8 + $0x88] sm:$0xf]
    %v2375 = vld [vmem:[#allocation8 + $0x8c] sm:$0xf]
    %v2376 = vld [vmem:[#allocation8 + $0x90] sm:$0xf]
    %v2377 = vld [vmem:[#allocation8 + $0x94] sm:$0xf]
    %v2378 = vld [vmem:[#allocation8 + $0x98] sm:$0xf]
    %v2379 = vld [vmem:[#allocation8 + $0x9c] sm:$0xf]
    %v2380 = vld [vmem:[#allocation8 + $0xa0] sm:$0xf]
    %v2381 = vld [vmem:[#allocation8 + $0xa4] sm:$0xf]
    %v2382 = vld [vmem:[#allocation8 + $0xa8] sm:$0xf]
    %v2383 = vld [vmem:[#allocation8 + $0xac] sm:$0xf]
    %v2384 = vld [vmem:[#allocation8 + $0xb0] sm:$0xf]
    %v2385 = vld [vmem:[#allocation8 + $0xb4] sm:$0xf]
    %v2386 = vld [vmem:[#allocation8 + $0xb8] sm:$0xf]
    %v2387 = vld [vmem:[#allocation8 + $0xbc] sm:$0xf]
    %v2388 = vld [vmem:[#allocation8 + $0xc0] sm:$0xf]
    %v2389 = vld [vmem:[#allocation8 + $0xc4] sm:$0xf]
    %v2390 = vld [vmem:[#allocation8 + $0xc8] sm:$0xf]
    %v2391 = vld [vmem:[#allocation8 + $0xcc] sm:$0xf]
    %v2392 = vld [vmem:[#allocation8 + $0xd0] sm:$0xf]
    %v2393 = vld [vmem:[#allocation8 + $0xd4] sm:$0xf]
    %v2394 = vld [vmem:[#allocation8 + $0xd8] sm:$0xf]
    %v2395 = vld [vmem:[#allocation8 + $0xdc] sm:$0xf]
    %v2396 = vld [vmem:[#allocation8 + $0xe0] sm:$0xf]
    %v2397 = vld [vmem:[#allocation8 + $0xe4] sm:$0xf]
    %v2398 = vld [vmem:[#allocation8 + $0xe8] sm:$0xf]
    %v2399 = vld [vmem:[#allocation8 + $0xec] sm:$0xf]
    %v2400 = vld [vmem:[#allocation8 + $0xf0] sm:$0xf]
    %v2401 = vld [vmem:[#allocation8 + $0xf4] sm:$0xf]
    %v2402 = vld [vmem:[#allocation8 + $0xf8] sm:$0xf]
    %v2403 = vld [vmem:[#allocation8 + $0xfc] sm:$0xf]
    %v2404 = vld [vmem:[#allocation8 + $0x100] sm:$0xf]
    %v2405 = vld [vmem:[#allocation8 + $0x104] sm:$0xf]
    %v2406 = vld [vmem:[#allocation8 + $0x108] sm:$0xf]
    %v2407 = vld [vmem:[#allocation8 + $0x10c] sm:$0xf]
    %v2408 = vld [vmem:[#allocation8 + $0x110] sm:$0xf]
    %v2409 = vld [vmem:[#allocation8 + $0x114] sm:$0xf]
    %v2410 = vld [vmem:[#allocation8 + $0x118] sm:$0xf]
    %v2411 = vld [vmem:[#allocation8 + $0x11c] sm:$0xf]
    %v2412 = vld [vmem:[#allocation8 + $0x120] sm:$0xf]
    %v2413 = vld [vmem:[#allocation8 + $0x124] sm:$0xf]
    %v2414 = vld [vmem:[#allocation8 + $0x128] sm:$0xf]
    %v2415 = vld [vmem:[#allocation8 + $0x12c] sm:$0xf]
    %v2416 = vld [vmem:[#allocation8 + $0x130] sm:$0xf]
    %v2417 = vld [vmem:[#allocation8 + $0x134] sm:$0xf]
    %v2418 = vld [vmem:[#allocation8 + $0x138] sm:$0xf]
    %v2419 = vld [vmem:[#allocation8 + $0x13c] sm:$0xf]
    %v2420 = vld [vmem:[#allocation8 + $0x140] sm:$0xf]
    %v2421 = vld [vmem:[#allocation8 + $0x144] sm:$0xf]
    %v2422 = vld [vmem:[#allocation8 + $0x148] sm:$0xf]
    %v2423 = vld [vmem:[#allocation8 + $0x14c] sm:$0xf]
    %v2424 = vld [vmem:[#allocation8 + $0x150] sm:$0xf]
    %v2425 = vld [vmem:[#allocation8 + $0x154] sm:$0xf]
    %v2426 = vld [vmem:[#allocation8 + $0x158] sm:$0xf]
    %v2427 = vld [vmem:[#allocation8 + $0x15c] sm:$0xf]
    %v2428 = vld [vmem:[#allocation8 + $0x160] sm:$0xf]
    %v2429 = vld [vmem:[#allocation8 + $0x164] sm:$0xf]
    %v2430 = vld [vmem:[#allocation8 + $0x168] sm:$0xf]
    %v2431 = vld [vmem:[#allocation8 + $0x16c] sm:$0xf]
    %v2432 = vld [vmem:[#allocation8 + $0x170] sm:$0xf]
    %v2433 = vld [vmem:[#allocation8 + $0x174] sm:$0xf]
    %v2434 = vld [vmem:[#allocation8 + $0x178] sm:$0xf]
    %v2435 = vld [vmem:[#allocation8 + $0x17c] sm:$0xf]
    %v2436 = vld [vmem:[#allocation10] sm:$0x1]
    %v2438 = vperm.slane %v2436, 0
    %v2536 = vunpack.c.l.b16 %v2340
    %v2537 = vunpack.c.l.b16 %v2341
    %v2538 = vunpack.c.l.b16 %v2342
    %v2539 = vunpack.c.l.b16 %v2343
    %v2540 = vunpack.c.l.b16 %v2344
    %v2541 = vunpack.c.l.b16 %v2345
    %v2542 = vunpack.c.l.b16 %v2346
    %v2543 = vunpack.c.l.b16 %v2347
    %v2544 = vunpack.c.l.b16 %v2348
    %v2545 = vunpack.c.l.b16 %v2349
    %v2546 = vunpack.c.l.b16 %v2350
    %v2547 = vunpack.c.l.b16 %v2351
    %v2548 = vunpack.c.l.b16 %v2352
    %v2549 = vunpack.c.l.b16 %v2353
    %v2550 = vunpack.c.l.b16 %v2354
    %v2551 = vunpack.c.l.b16 %v2355
    %v2552 = vunpack.c.l.b16 %v2356
    %v2553 = vunpack.c.l.b16 %v2357
    %v2554 = vunpack.c.l.b16 %v2358
    %v2555 = vunpack.c.l.b16 %v2359
    %v2556 = vunpack.c.l.b16 %v2360
    %v2557 = vunpack.c.l.b16 %v2361
    %v2558 = vunpack.c.l.b16 %v2362
    %v2559 = vunpack.c.l.b16 %v2363
    %v2560 = vunpack.c.l.b16 %v2364
    %v2561 = vunpack.c.l.b16 %v2365
    %v2562 = vunpack.c.l.b16 %v2366
    %v2563 = vunpack.c.l.b16 %v2367
    %v2564 = vunpack.c.l.b16 %v2368
    %v2565 = vunpack.c.l.b16 %v2369
    %v2566 = vunpack.c.l.b16 %v2370
    %v2567 = vunpack.c.l.b16 %v2371
    %v2568 = vunpack.c.l.b16 %v2372
    %v2569 = vunpack.c.l.b16 %v2373
    %v2570 = vunpack.c.l.b16 %v2374
    %v2571 = vunpack.c.l.b16 %v2375
    %v2572 = vunpack.c.l.b16 %v2376
    %v2573 = vunpack.c.l.b16 %v2377
    %v2574 = vunpack.c.l.b16 %v2378
    %v2575 = vunpack.c.l.b16 %v2379
    %v2576 = vunpack.c.l.b16 %v2380
    %v2577 = vunpack.c.l.b16 %v2381
    %v2578 = vunpack.c.l.b16 %v2382
    %v2579 = vunpack.c.l.b16 %v2383
    %v2580 = vunpack.c.l.b16 %v2384
    %v2581 = vunpack.c.l.b16 %v2385
    %v2582 = vunpack.c.l.b16 %v2386
    %v2583 = vunpack.c.l.b16 %v2387
    %v2584 = vunpack.c.l.b16 %v2388
    %v2585 = vunpack.c.l.b16 %v2389
    %v2586 = vunpack.c.l.b16 %v2390
    %v2587 = vunpack.c.l.b16 %v2391
    %v2588 = vunpack.c.l.b16 %v2392
    %v2589 = vunpack.c.l.b16 %v2393
    %v2590 = vunpack.c.l.b16 %v2394
    %v2591 = vunpack.c.l.b16 %v2395
    %v2592 = vunpack.c.l.b16 %v2396
    %v2593 = vunpack.c.l.b16 %v2397
    %v2594 = vunpack.c.l.b16 %v2398
    %v2595 = vunpack.c.l.b16 %v2399
    %v2596 = vunpack.c.l.b16 %v2400
    %v2597 = vunpack.c.l.b16 %v2401
    %v2598 = vunpack.c.l.b16 %v2402
    %v2599 = vunpack.c.l.b16 %v2403
    %v2600 = vunpack.c.l.b16 %v2404
    %v2601 = vunpack.c.l.b16 %v2405
    %v2602 = vunpack.c.l.b16 %v2406
    %v2603 = vunpack.c.l.b16 %v2407
    %v2604 = vunpack.c.l.b16 %v2408
    %v2605 = vunpack.c.l.b16 %v2409
    %v2606 = vunpack.c.l.b16 %v2410
    %v2607 = vunpack.c.l.b16 %v2411
    %v2608 = vunpack.c.l.b16 %v2412
    %v2609 = vunpack.c.l.b16 %v2413
    %v2610 = vunpack.c.l.b16 %v2414
    %v2611 = vunpack.c.l.b16 %v2415
    %v2612 = vunpack.c.l.b16 %v2416
    %v2613 = vunpack.c.l.b16 %v2417
    %v2614 = vunpack.c.l.b16 %v2418
    %v2615 = vunpack.c.l.b16 %v2419
    %v2616 = vunpack.c.l.b16 %v2420
    %v2617 = vunpack.c.l.b16 %v2421
    %v2618 = vunpack.c.l.b16 %v2422
    %v2619 = vunpack.c.l.b16 %v2423
    %v2620 = vunpack.c.l.b16 %v2424
    %v2621 = vunpack.c.l.b16 %v2425
    %v2622 = vunpack.c.l.b16 %v2426
    %v2623 = vunpack.c.l.b16 %v2427
    %v2624 = vunpack.c.l.b16 %v2428
    %v2625 = vunpack.c.l.b16 %v2429
    %v2626 = vunpack.c.l.b16 %v2430
    %v2627 = vunpack.c.l.b16 %v2431
    %v2628 = vunpack.c.l.b16 %v2432
    %v2629 = vunpack.c.l.b16 %v2433
    %v2630 = vunpack.c.l.b16 %v2434
    %v2631 = vunpack.c.l.b16 %v2435
    %v2632 = vpack.c.b16 %v2537, %v2536
    %v2633 = vpack.c.b16 %v2539, %v2538
    %v2634 = vpack.c.b16 %v2541, %v2540
    %v2635 = vpack.c.b16 %v2543, %v2542
    %v2636 = vpack.c.b16 %v2545, %v2544
    %v2637 = vpack.c.b16 %v2547, %v2546
    %v2638 = vpack.c.b16 %v2549, %v2548
    %v2639 = vpack.c.b16 %v2551, %v2550
    %v2640 = vpack.c.b16 %v2553, %v2552
    %v2641 = vpack.c.b16 %v2555, %v2554
    %v2642 = vpack.c.b16 %v2557, %v2556
    %v2643 = vpack.c.b16 %v2559, %v2558
    %v2644 = vpack.c.b16 %v2561, %v2560
    %v2645 = vpack.c.b16 %v2563, %v2562
    %v2646 = vpack.c.b16 %v2565, %v2564
    %v2647 = vpack.c.b16 %v2567, %v2566
    %v2648 = vpack.c.b16 %v2569, %v2568
    %v2649 = vpack.c.b16 %v2571, %v2570
    %v2650 = vpack.c.b16 %v2573, %v2572
    %v2651 = vpack.c.b16 %v2575, %v2574
    %v2652 = vpack.c.b16 %v2577, %v2576
    %v2653 = vpack.c.b16 %v2579, %v2578
    %v2654 = vpack.c.b16 %v2581, %v2580
    %v2655 = vpack.c.b16 %v2583, %v2582
    %v2656 = vpack.c.b16 %v2585, %v2584
    %v2657 = vpack.c.b16 %v2587, %v2586
    %v2658 = vpack.c.b16 %v2589, %v2588
    %v2659 = vpack.c.b16 %v2591, %v2590
    %v2660 = vpack.c.b16 %v2593, %v2592
    %v2661 = vpack.c.b16 %v2595, %v2594
    %v2662 = vpack.c.b16 %v2597, %v2596
    %v2663 = vpack.c.b16 %v2599, %v2598
    %v2664 = vpack.c.b16 %v2601, %v2600
    %v2665 = vpack.c.b16 %v2603, %v2602
    %v2666 = vpack.c.b16 %v2605, %v2604
    %v2667 = vpack.c.b16 %v2607, %v2606
    %v2668 = vpack.c.b16 %v2609, %v2608
    %v2669 = vpack.c.b16 %v2611, %v2610
    %v2670 = vpack.c.b16 %v2613, %v2612
    %v2671 = vpack.c.b16 %v2615, %v2614
    %v2672 = vpack.c.b16 %v2617, %v2616
    %v2673 = vpack.c.b16 %v2619, %v2618
    %v2674 = vpack.c.b16 %v2621, %v2620
    %v2675 = vpack.c.b16 %v2623, %v2622
    %v2676 = vpack.c.b16 %v2625, %v2624
    %v2677 = vpack.c.b16 %v2627, %v2626
    %v2678 = vpack.c.b16 %v2629, %v2628
    %v2679 = vpack.c.b16 %v2631, %v2630
    %2728 = vmatpush.bf16.msra.mxu0 %v2639
    %2729 = vmatpush.bf16.msra.mxu0 %v2638
    %2730 = vmatpush.bf16.msra.mxu0 %v2637
    %2731 = vmatpush.bf16.msra.mxu0 %v2636
    %2732 = vmatpush.bf16.msra.mxu0 %v2635
    %2733 = vmatpush.bf16.msra.mxu0 %v2634
    %2734 = vmatpush.bf16.msra.mxu0 %v2633
    %2735 = vmatpush.bf16.msra.mxu0 %v2632
    %2736 = vmatmul.bf16.gmra.mxu0 %v2334
    %v2737 = vpop.f32.mrf.mxu0
    %v2738 = vadd.f32 %v2438, %v2737
    %v2739 = vpop.f32.mrf.mxu0
    %2740 = vdwg.mxu0
    %2741 = vmatpush.bf16.msra.mxu0 %v2647
    %2742 = vmatpush.bf16.msra.mxu0 %v2646
    %2743 = vmatpush.bf16.msra.mxu0 %v2645
    %2744 = vmatpush.bf16.msra.mxu0 %v2644
    %2745 = vmatpush.bf16.msra.mxu0 %v2643
    %2746 = vmatpush.bf16.msra.mxu0 %v2642
    %2747 = vmatpush.bf16.msra.mxu0 %v2641
    %2748 = vmatpush.bf16.msra.mxu0 %v2640
    %2749 = vmatmul.bf16.gmra.mxu0 %v2335
    %v2750 = vpop.f32.mrf.mxu0
    %v2751 = vadd.f32 %v2738, %v2750
    %v2752 = vpop.f32.mrf.mxu0
    %2753 = vdwg.mxu0
    %2754 = vmatpush.bf16.msra.mxu0 %v2655
    %2755 = vmatpush.bf16.msra.mxu0 %v2654
    %2756 = vmatpush.bf16.msra.mxu0 %v2653
    %2757 = vmatpush.bf16.msra.mxu0 %v2652
    %2758 = vmatpush.bf16.msra.mxu0 %v2651
    %2759 = vmatpush.bf16.msra.mxu0 %v2650
    %2760 = vmatpush.bf16.msra.mxu0 %v2649
    %2761 = vmatpush.bf16.msra.mxu0 %v2648
    %2762 = vmatmul.bf16.gmra.mxu0 %v2336
    %v2763 = vpop.f32.mrf.mxu0
    %v2764 = vadd.f32 %v2751, %v2763
    %v2765 = vpop.f32.mrf.mxu0
    %2766 = vdwg.mxu0
    %2767 = vmatpush.bf16.msra.mxu0 %v2663
    %2768 = vmatpush.bf16.msra.mxu0 %v2662
    %2769 = vmatpush.bf16.msra.mxu0 %v2661
    %2770 = vmatpush.bf16.msra.mxu0 %v2660
    %2771 = vmatpush.bf16.msra.mxu0 %v2659
    %2772 = vmatpush.bf16.msra.mxu0 %v2658
    %2773 = vmatpush.bf16.msra.mxu0 %v2657
    %2774 = vmatpush.bf16.msra.mxu0 %v2656
    %2775 = vmatmul.bf16.gmra.mxu0 %v2337
    %v2776 = vpop.f32.mrf.mxu0
    %v2777 = vadd.f32 %v2764, %v2776
    %v2778 = vpop.f32.mrf.mxu0
    %2779 = vdwg.mxu0
    %2780 = vmatpush.bf16.msra.mxu0 %v2671
    %2781 = vmatpush.bf16.msra.mxu0 %v2670
    %2782 = vmatpush.bf16.msra.mxu0 %v2669
    %2783 = vmatpush.bf16.msra.mxu0 %v2668
    %2784 = vmatpush.bf16.msra.mxu0 %v2667
    %2785 = vmatpush.bf16.msra.mxu0 %v2666
    %2786 = vmatpush.bf16.msra.mxu0 %v2665
    %2787 = vmatpush.bf16.msra.mxu0 %v2664
    %2788 = vmatmul.bf16.gmra.mxu0 %v2338
    %v2789 = vpop.f32.mrf.mxu0
    %v2790 = vadd.f32 %v2777, %v2789
    %v2791 = vpop.f32.mrf.mxu0
    %2792 = vdwg.mxu0
    %2793 = vmatpush.bf16.msra.mxu0 %v2679
    %2794 = vmatpush.bf16.msra.mxu0 %v2678
    %2795 = vmatpush.bf16.msra.mxu0 %v2677
    %2796 = vmatpush.bf16.msra.mxu0 %v2676
    %2797 = vmatpush.bf16.msra.mxu0 %v2675
    %2798 = vmatpush.bf16.msra.mxu0 %v2674
    %2799 = vmatpush.bf16.msra.mxu0 %v2673
    %2800 = vmatpush.bf16.msra.mxu0 %v2672
    %2801 = vmatmul.bf16.gmra.mxu0 %v2339
    %v2802 = vpop.f32.mrf.mxu0
    %v2803 = vadd.f32 %v2790, %v2802
    %v2804 = vpop.f32.mrf.mxu0
    %2805 = vdwg.mxu0
    %2806 = vst [vmem:[#allocation11] sm:$0x3] %v2803
    // Predicated region
    $region42: #{tpu_custom_call.1} parent=1 // pred_check
      _
    $region43: #{tpu_custom_call.1} parent=1 // pred_check_branch
      %2808 = sbr.rel (0) target = $region45
    $region44: #{tpu_custom_call.1} parent=1 // pred_region
      %2810 = vsyncadd [#allocation4], 0
      %s2812 = sshll.u32 [#allocation11], 4
      %s2813 = int_to_ptr.vmem [resolvable:$true] %s2812
      %s2814 = sshll.u32 %s5, 4
      %s2815 = int_to_ptr.hbm [resolvable:$true] %s2814
      %2817 = dma.vmem_to_hbm [thread:$0]  %s2813, 32, %s2815, [#allocation4]
    $region45: #{tpu_custom_call.1} parent=1 // pred_fallthru
      _
    // Predicated region
    $region46: #{tpu_custom_call.1} parent=1 // pred_check
      _
    $region47: #{tpu_custom_call.1} parent=1 // pred_check_branch
      %2819 = sbr.rel (0) target = $region49
    $region48: #{tpu_custom_call.1} parent=1 // pred_region
      %2821 = dma.done [#allocation4], 32
    $region49: #{tpu_custom_call.1} parent=1 // pred_fallthru
      _
    %2822 = vsyncpa [#allocation3], 1
    %2823 = vsyncpa [#allocation6], 1
    %2824 = vsyncpa [#allocation9], 1
    %2825 = vsyncpa [#allocation4], 1

</llo_original>
